<compile_context>
chip_gen: v6e
topology: v6e:2x2x1
jax: 0.10.0
libtpu: 0.0.40
codegen_flags: <defaults>
</compile_context>

<pallas_src>
import math

import jax
import jax.numpy as jnp
from jax.experimental import pallas as pl
from jax.experimental.pallas import tpu as pltpu


def f2_kernel(x_ref, w0_ref, b0_ref, w1_ref, b1_ref, w2_ref, b2_ref, o_ref):
    """Fused 3-layer MLP on one (tile_n, d) batch tile.

    x arrives in f32 and is downcast to bf16 in-kernel (free VPU work in a
    memory-bound regime); weights are bf16 MXU operands; every matmul
    accumulates in f32; bias add + ReLU stay in f32; activations are recast to
    bf16 only as the next MXU operand.
    """
    x = x_ref[...].astype(jnp.bfloat16)
    h = jnp.dot(x, w0_ref[...], preferred_element_type=jnp.float32) + b0_ref[...]
    h = jnp.maximum(h, 0.0).astype(jnp.bfloat16)
    h = jnp.dot(h, w1_ref[...], preferred_element_type=jnp.float32) + b1_ref[...]
    h = jnp.maximum(h, 0.0).astype(jnp.bfloat16)
    out = jnp.dot(h, w2_ref[...], preferred_element_type=jnp.float32) + b2_ref[...]
    o_ref[...] = out.astype(o_ref.dtype)


def _round_up(v, m):
    return ((v + m - 1) // m) * m


def f2_forward(x, w0, b0, w1, b1, w2, b2, *, tile_n=512):
    """Launch a 1-D batch grid with bf16 weights resident in VMEM (constant
    index_maps). h1 and k are zero-padded to 128 lanes (exactness preserved);
    the batch is tiled into a balanced (even when >1) number of tiles."""
    n, d = x.shape
    h0 = w0.shape[1]
    h1 = w1.shape[1]
    k = w2.shape[1]

    # Lane-dense padding of the hidden h1 dim and the class dim.
    k_pad = _round_up(k, 128)
    h1_pad = _round_up(h1, 128)

    # Balanced batch tiling: pick the tile count first (even when >1 so the
    # "parallel" axis shards evenly across v7x's two TensorCores), then
    # rebalance tile_n to a multiple of 8 sublanes. Ragged tails are handled
    # by Pallas partial blocks (masked output stores), so x is NOT padded.
    num_tiles = pl.cdiv(n, tile_n)
    if num_tiles > 1 and num_tiles % 2 == 1:
        num_tiles += 1
    tile_n = _round_up(pl.cdiv(n, num_tiles), 8)
    grid = (pl.cdiv(n, tile_n),)

    # Weight/bias preparation (tiny, one-time): bf16 MXU operands, f32 biases,
    # zero-padding of w1 columns / b1 / w2 rows (h1 -> h1_pad) and of w2
    # columns / b2 (k -> k_pad). relu(0) = 0 and zero w2 rows keep this exact.
    w0_b = w0.astype(jnp.bfloat16)
    b0_2d = b0.reshape(1, h0).astype(jnp.float32)
    w1_p = jnp.zeros((h0, h1_pad), jnp.bfloat16).at[:, :h1].set(w1.astype(jnp.bfloat16))
    b1_2d = jnp.zeros((1, h1_pad), jnp.float32).at[:, :h1].set(b1.astype(jnp.float32))
    w2_p = jnp.zeros((h1_pad, k_pad), jnp.bfloat16).at[:h1, :k].set(w2.astype(jnp.bfloat16))
    b2_2d = jnp.zeros((1, k_pad), jnp.float32).at[:, :k].set(b2.astype(jnp.float32))

    # VMEM budget: double-buffered x (f32) / out (bf16) tiles, resident
    # weights (counted x2 conservatively), f32 intermediates, plus headroom.
    # Stays far below v7x's 64 MiB per-TC VMEM at these dims.
    weight_bytes = 2 * ((d * h0 + h0 * h1_pad + h1_pad * k_pad) * 2
                        + (h0 + h1_pad + k_pad) * 4)
    tile_bytes = 2 * (tile_n * d * 4 + tile_n * k_pad * 2)
    interm_bytes = 2 * tile_n * (h0 + h1_pad) * 4
    vmem_limit = int(weight_bytes + tile_bytes + interm_bytes + (8 << 20))

    cost = pl.CostEstimate(
        flops=2 * n * (d * h0 + h0 * h1_pad + h1_pad * k_pad),
        transcendentals=0,
        bytes_accessed=(n * d * 4
                        + (d * h0 + h0 * h1_pad + h1_pad * k_pad) * 2
                        + (h0 + h1_pad + k_pad) * 4
                        + n * k_pad * 2),
    )

    out_padded = pl.pallas_call(
        f2_kernel,
        out_shape=jax.ShapeDtypeStruct((n, k_pad), jnp.bfloat16),
        grid=grid,
        in_specs=[
            pl.BlockSpec((tile_n, d), lambda i: (i, 0)),      # x tile (pipelined, f32)
            pl.BlockSpec((d, h0), lambda i: (0, 0)),          # w0 resident
            pl.BlockSpec((1, h0), lambda i: (0, 0)),          # b0 resident
            pl.BlockSpec((h0, h1_pad), lambda i: (0, 0)),     # w1 resident (padded)
            pl.BlockSpec((1, h1_pad), lambda i: (0, 0)),      # b1 resident (padded)
            pl.BlockSpec((h1_pad, k_pad), lambda i: (0, 0)),  # w2 resident (padded)
            pl.BlockSpec((1, k_pad), lambda i: (0, 0)),       # b2 resident (padded)
        ],
        out_specs=pl.BlockSpec((tile_n, k_pad), lambda i: (i, 0)),
        compiler_params=pltpu.CompilerParams(
            dimension_semantics=("parallel",),
            vmem_limit_bytes=vmem_limit,
        ),
        cost_estimate=cost,
    )(x, w0_b, b0_2d, w1_p, b1_2d, w2_p, b2_2d)

    # Real rows/classes only; value precision is bf16 (documented tolerance),
    # dtype restored to f32 to match the module's float logits.
    return out_padded[:n, :k].astype(jnp.float32)


def init_params(key, d, h0, h1, k):
    """Deterministic Uniform(-alpha, alpha) init, mirroring the PyTorch module."""
    a0 = 1.0 / math.sqrt(d)
    a01 = 1.0 / math.sqrt(h0)
    a1 = 1.0 / math.sqrt(h1)
    ks = jax.random.split(key, 6)
    w0 = jax.random.uniform(ks[0], (d, h0), jnp.float32, -a0, a0)
    b0 = jax.random.uniform(ks[1], (h0,), jnp.float32, -a0, a0)
    w1 = jax.random.uniform(ks[2], (h0, h1), jnp.float32, -a01, a01)
    b1 = jax.random.uniform(ks[3], (h1,), jnp.float32, -a01, a01)
    w2 = jax.random.uniform(ks[4], (h1, k), jnp.float32, -a1, a1)
    b2 = jax.random.uniform(ks[5], (k,), jnp.float32, -a1, a1)
    return w0, b0, w1, b1, w2, b2


if __name__ == "__main__":
    # Small shapes consistent with the module (MNIST-like MLP): x is (n, d).
    # n deliberately NOT a multiple of the tile size to exercise the ragged path.
    n, d, h0, h1, k = 600, 128, 128, 64, 10

    key = jax.random.PRNGKey(0)
    key_x, key_p = jax.random.split(key)
    x = jax.random.normal(key_x, (n, d), jnp.float32)
    w0, b0, w1, b1, w2, b2 = init_params(key_p, d, h0, h1, k)

    out = f2_forward(x, w0, b0, w1, b1, w2, b2)
    out = jax.block_until_ready(out)

    # Pure-JAX reference mirroring the kernel's bf16-operand / f32-accumulate
    # math and the final bf16 output store.
    xb = x.astype(jnp.bfloat16)
    r = jnp.dot(xb, w0.astype(jnp.bfloat16),
                preferred_element_type=jnp.float32) + b0
    r = jnp.maximum(r, 0.0).astype(jnp.bfloat16)
    r = jnp.dot(r, w1.astype(jnp.bfloat16),
                preferred_element_type=jnp.float32) + b1
    r = jnp.maximum(r, 0.0).astype(jnp.bfloat16)
    ref = jnp.dot(r, w2.astype(jnp.bfloat16),
                  preferred_element_type=jnp.float32) + b2
    ref = ref.astype(jnp.bfloat16).astype(jnp.float32)

    assert out.shape == (n, k)
    assert out.dtype == jnp.float32
    assert jnp.allclose(out, ref, atol=1e-2, rtol=1e-2)

    print("KERNEL_OK")
</pallas_src>

<mosaic_0001>
module attributes {stable_mosaic.version = 11 : i64} {
  func.func @f2_kernel(%arg0: i32, %arg1: memref<304x128xf32, #tpu.memory_space<vmem>>, %arg2: memref<128x128xbf16, #tpu.memory_space<vmem>>, %arg3: memref<1x128xf32, #tpu.memory_space<vmem>>, %arg4: memref<128x128xbf16, #tpu.memory_space<vmem>>, %arg5: memref<1x128xf32, #tpu.memory_space<vmem>>, %arg6: memref<128x128xbf16, #tpu.memory_space<vmem>>, %arg7: memref<1x128xf32, #tpu.memory_space<vmem>>, %arg8: memref<304x128xbf16, #tpu.memory_space<vmem>>) attributes {dimension_semantics = [#tpu.dimension_semantics<parallel>], iteration_bounds = array<i64: 2>, scalar_prefetch = 0 : i64, scratch_operands = 0 : i64, tpu.core_type = #tpu.core_type<tc>, window_params = [{transform_indices = @transform_0, window_bounds = array<i64: 304, 128>}, {pipeline_mode = #tpu.pipeline_mode<synchronous>, transform_indices = @transform_1, window_bounds = array<i64: 128, 128>}, {pipeline_mode = #tpu.pipeline_mode<synchronous>, transform_indices = @transform_2, window_bounds = array<i64: 1, 128>}, {pipeline_mode = #tpu.pipeline_mode<synchronous>, transform_indices = @transform_3, window_bounds = array<i64: 128, 128>}, {pipeline_mode = #tpu.pipeline_mode<synchronous>, transform_indices = @transform_4, window_bounds = array<i64: 1, 128>}, {pipeline_mode = #tpu.pipeline_mode<synchronous>, transform_indices = @transform_5, window_bounds = array<i64: 128, 128>}, {pipeline_mode = #tpu.pipeline_mode<synchronous>, transform_indices = @transform_6, window_bounds = array<i64: 1, 128>}, {transform_indices = @transform_7, window_bounds = array<i64: 304, 128>}]} {
    %c0 = arith.constant 0 : index
    %c0_0 = arith.constant 0 : index
    %0 = vector.load %arg1[%c0, %c0_0] : memref<304x128xf32, #tpu.memory_space<vmem>>, vector<304x128xf32>
    %1 = arith.truncf %0 : vector<304x128xf32> to vector<304x128xbf16>
    %c0_1 = arith.constant 0 : index
    %c0_2 = arith.constant 0 : index
    %2 = vector.load %arg2[%c0_1, %c0_2] : memref<128x128xbf16, #tpu.memory_space<vmem>>, vector<128x128xbf16>
    %cst = arith.constant dense<0.000000e+00> : vector<304x128xf32>
    %3 = tpu.matmul %1, %2, %cst {dimension_numbers = #tpu.dot_dimension_numbers<[1], [0], [0], [1], [0, 0, 1, 1], [], []>} : vector<304x128xbf16>, vector<128x128xbf16>, vector<304x128xf32> -> vector<304x128xf32>
    %c0_3 = arith.constant 0 : index
    %c0_4 = arith.constant 0 : index
    %4 = vector.load %arg3[%c0_3, %c0_4] : memref<1x128xf32, #tpu.memory_space<vmem>>, vector<1x128xf32>
    %5 = vector.broadcast %4 : vector<1x128xf32> to vector<304x128xf32>
    %6 = arith.addf %3, %5 : vector<304x128xf32>
    %cst_5 = arith.constant 0.000000e+00 : f32
    %7 = vector.broadcast %cst_5 : f32 to vector<304x128xf32>
    %8 = arith.maximumf %6, %7 : vector<304x128xf32>
    %9 = arith.truncf %8 : vector<304x128xf32> to vector<304x128xbf16>
    %c0_6 = arith.constant 0 : index
    %c0_7 = arith.constant 0 : index
    %10 = vector.load %arg4[%c0_6, %c0_7] : memref<128x128xbf16, #tpu.memory_space<vmem>>, vector<128x128xbf16>
    %cst_8 = arith.constant dense<0.000000e+00> : vector<304x128xf32>
    %11 = tpu.matmul %9, %10, %cst_8 {dimension_numbers = #tpu.dot_dimension_numbers<[1], [0], [0], [1], [0, 0, 1, 1], [], []>} : vector<304x128xbf16>, vector<128x128xbf16>, vector<304x128xf32> -> vector<304x128xf32>
    %c0_9 = arith.constant 0 : index
    %c0_10 = arith.constant 0 : index
    %12 = vector.load %arg5[%c0_9, %c0_10] : memref<1x128xf32, #tpu.memory_space<vmem>>, vector<1x128xf32>
    %13 = vector.broadcast %12 : vector<1x128xf32> to vector<304x128xf32>
    %14 = arith.addf %11, %13 : vector<304x128xf32>
    %cst_11 = arith.constant 0.000000e+00 : f32
    %15 = vector.broadcast %cst_11 : f32 to vector<304x128xf32>
    %16 = arith.maximumf %14, %15 : vector<304x128xf32>
    %17 = arith.truncf %16 : vector<304x128xf32> to vector<304x128xbf16>
    %c0_12 = arith.constant 0 : index
    %c0_13 = arith.constant 0 : index
    %18 = vector.load %arg6[%c0_12, %c0_13] : memref<128x128xbf16, #tpu.memory_space<vmem>>, vector<128x128xbf16>
    %cst_14 = arith.constant dense<0.000000e+00> : vector<304x128xf32>
    %19 = tpu.matmul %17, %18, %cst_14 {dimension_numbers = #tpu.dot_dimension_numbers<[1], [0], [0], [1], [0, 0, 1, 1], [], []>} : vector<304x128xbf16>, vector<128x128xbf16>, vector<304x128xf32> -> vector<304x128xf32>
    %c0_15 = arith.constant 0 : index
    %c0_16 = arith.constant 0 : index
    %20 = vector.load %arg7[%c0_15, %c0_16] : memref<1x128xf32, #tpu.memory_space<vmem>>, vector<1x128xf32>
    %21 = vector.broadcast %20 : vector<1x128xf32> to vector<304x128xf32>
    %22 = arith.addf %19, %21 : vector<304x128xf32>
    %23 = arith.truncf %22 : vector<304x128xf32> to vector<304x128xbf16>
    %c0_17 = arith.constant 0 : index
    %c0_18 = arith.constant 0 : index
    %24 = vector.load %arg8[%c0_17, %c0_18] : memref<304x128xbf16, #tpu.memory_space<vmem>>, vector<304x128xbf16>
    tpu.vector_store %arg8[%c0_17, %c0_18], %23 {strides = array<i32>} : memref<304x128xbf16, #tpu.memory_space<vmem>>, vector<304x128xbf16>,
    return
  }
  func.func @transform_0(%arg0: i32) -> (i32, i32) {
    %c0_i32 = arith.constant 0 : i32
    %c0_i32_0 = arith.constant 0 : i32
    return %arg0, %c0_i32 : i32, i32
  }
  func.func @transform_1(%arg0: i32) -> (i32, i32) {
    %c0_i32 = arith.constant 0 : i32
    %c0_i32_0 = arith.constant 0 : i32
    %c0_i32_1 = arith.constant 0 : i32
    return %c0_i32, %c0_i32_0 : i32, i32
  }
  func.func @transform_2(%arg0: i32) -> (i32, i32) {
    %c0_i32 = arith.constant 0 : i32
    %c0_i32_0 = arith.constant 0 : i32
    %c0_i32_1 = arith.constant 0 : i32
    return %c0_i32, %c0_i32_0 : i32, i32
  }
  func.func @transform_3(%arg0: i32) -> (i32, i32) {
    %c0_i32 = arith.constant 0 : i32
    %c0_i32_0 = arith.constant 0 : i32
    %c0_i32_1 = arith.constant 0 : i32
    return %c0_i32, %c0_i32_0 : i32, i32
  }
  func.func @transform_4(%arg0: i32) -> (i32, i32) {
    %c0_i32 = arith.constant 0 : i32
    %c0_i32_0 = arith.constant 0 : i32
    %c0_i32_1 = arith.constant 0 : i32
    return %c0_i32, %c0_i32_0 : i32, i32
  }
  func.func @transform_5(%arg0: i32) -> (i32, i32) {
    %c0_i32 = arith.constant 0 : i32
    %c0_i32_0 = arith.constant 0 : i32
    %c0_i32_1 = arith.constant 0 : i32
    return %c0_i32, %c0_i32_0 : i32, i32
  }
  func.func @transform_6(%arg0: i32) -> (i32, i32) {
    %c0_i32 = arith.constant 0 : i32
    %c0_i32_0 = arith.constant 0 : i32
    %c0_i32_1 = arith.constant 0 : i32
    return %c0_i32, %c0_i32_0 : i32, i32
  }
  func.func @transform_7(%arg0: i32) -> (i32, i32) {
    %c0_i32 = arith.constant 0 : i32
    %c0_i32_0 = arith.constant 0 : i32
    return %arg0, %c0_i32 : i32, i32
  }
}

</mosaic_0001>

<llo_original>
// kernel: tpu_custom_call.1
$region0: #{tpu_custom_call.1}
  #allocation0 [shape = 'u32[]', space=smem, size = 0x4, offset = 0x4, fixed_abs, tag = 'smem constant byte address 0x4 - core index']
  #allocation1 [shape = 'u32[144,128]{1,0:T(1,128)}', space=vmem, size = 0x12000, scoped, tag = 'internal scratch']
  %s0 = inlined_call_operand.hbm [shape: f32[600,128], index: 0, kind: input, shape index: {}]
  %s1 = inlined_call_operand.hbm [shape: bf16[128,128], index: 1, kind: input, shape index: {}]
  %s2 = inlined_call_operand.vmem [shape: f32[1,128], index: 2, kind: input, shape index: {}]
  %s3 = inlined_call_operand.hbm [shape: bf16[128,128], index: 3, kind: input, shape index: {}]
  %s4 = inlined_call_operand.vmem [shape: f32[1,128], index: 4, kind: input, shape index: {}]
  %s5 = inlined_call_operand.hbm [shape: bf16[128,128], index: 5, kind: input, shape index: {}]
  %s6 = inlined_call_operand.vmem [shape: f32[1,128], index: 6, kind: input, shape index: {}]
  %s7 = inlined_call_operand.hbm [shape: bf16[600,128], index: 7, kind: output, shape index: {}]
  %s8 = sld [smem:[#allocation0]]
  $region77: #{tpu_custom_call.1} parent=0
    _
  %s10 = ssub.s32 1, %s8
  %s11 = scalar_select 0, %s10, %s8
  $region1: #{tpu_custom_call.1} parent=0
    #allocation2 [shape = 'u8[311296]{0}', space=vmem, size = 0x4c000, scoped, tag = 'input window, operand 0']
    #allocation3 [shape = 's32[2]{0}', space=sflag, size = 0x8, scoped, tag = 'scoped memory for tpu_custom_call.1']
    #allocation4 [shape = 's32[2]{0}', space=sflag, size = 0x8, scoped, tag = 'scoped memory for tpu_custom_call.1']
    #allocation5 [shape = 'u8[32768]{0}', space=vmem, size = 0x8000, scoped, tag = 'input window, operand 1, single buffered']
    #allocation6 [shape = 's32[1]{0}', space=sflag, size = 0x4, scoped, tag = 'scoped memory for tpu_custom_call.1']
    #allocation7 [shape = 'u8[32768]{0}', space=vmem, size = 0x8000, scoped, tag = 'input window, operand 3, single buffered']
    #allocation8 [shape = 'u8[32768]{0}', space=vmem, size = 0x8000, scoped, tag = 'input window, operand 5, single buffered']
    #allocation9 [shape = 's32[1]{0}', space=sflag, size = 0x4, scoped, tag = 'scoped memory for tpu_custom_call.1']
    #allocation10 [shape = 'u8[155648]{0}', space=vmem, size = 0x26000, scoped, tag = 'output window, operand 0']
    %12 = vsyncpa [#allocation3], 0
    %s13 = scalar_lea.sflag [#allocation3], 1
    %14 = vsyncpa %s13, 0
    %15 = vsyncpa [#allocation6], 0
    %16 = vsyncpa [#allocation9], 0
    %17 = vsyncpa [#allocation4], 0
    %s18 = scalar_lea.sflag [#allocation4], 1
    %19 = vsyncpa %s18, 0
    loop: start=0, step=1, limit=4
    $region2: #{tpu_custom_call.1} parent=1 // loop_pre_header
      _
    $region3: #{tpu_custom_call.1} parent=1 // loop_header
      %s21 = sphi 0, %s25
      %p22 = scmp.ge.s32.totalorder %s21, 4
      %s31 = sphi 0, %s33
      %s34 = sphi 0, %s31
      %s35 = sphi 0, %s34
      %s51 = sphi 0, %s35
      %s55 = sphi 0, %s55
      %s57 = sphi 0, %s55
      %s58 = sphi 0, %s57
      %s72 = sphi 0, %s58
      %s76 = sphi 0, %s76
      %s78 = sphi 0, %s76
      %s79 = sphi 0, %s78
      %s93 = sphi 0, %s79
      %s97 = sphi 0, %s97
      %s99 = sphi 0, %s97
      %s100 = sphi 0, %s99
      %s114 = sphi 0, %s100
      %s118 = sphi 0, %s118
      %s120 = sphi 0, %s118
      %s121 = sphi 0, %s120
      %s135 = sphi 0, %s121
      %s139 = sphi 0, %s139
      %s141 = sphi 0, %s139
      %s142 = sphi 0, %s141
      %s156 = sphi 0, %s142
      %s160 = sphi 0, %s160
      %s162 = sphi 0, %s160
      %s163 = sphi 0, %s162
      %s177 = sphi 0, %s163
      %s183 = sphi 0, %s185
      %s186 = sphi 0, %s183
      %s187 = sphi 0, %s186
      %s203 = sphi 0, %s187
    $region4: #{tpu_custom_call.1} parent=1 // loop_header_branch
      %24 = sbr.rel (%p22) target = $region8
    $region5: #{tpu_custom_call.1} parent=1 // loop_body
      %s26 = ssub.s32 %s21, 1
      %s27 = ssub.s32 %s21, 2
      %s28 = sadd.s32 %s21, 1
      %s29 = ssub.s32 %s21, %s28
      %p30 = scmp.eq.s32.totalorder %s29, 0
      %s32 = sadd.s32 %s31, 1
      %s33 = scalar_select %p30, %s31, %s32
      %p36 = pneg %p30
      %p37 = scmp.eq.s32.totalorder %s21, 1
      %p38 = por %p36, %p37
      %p39 = scmp.ne.s32.totalorder %s31, %s34
      %p40 = scmp.eq.s32.totalorder %s21, 0
      %p41 = por %p39, %p40
      %p42 = scmp.ne.s32.totalorder %s31, %s34
      %p43 = scmp.eq.s32.totalorder %s26, 1
      %p44 = por %p42, %p43
      %p45 = scmp.ne.s32.totalorder %s34, %s35
      %p46 = scmp.eq.s32.totalorder %s26, 0
      %p47 = por %p45, %p46
      %p48 = scmp.ne.s32.totalorder %s34, %s35
      %p49 = scmp.eq.s32.totalorder %s27, 1
      %p50 = por %p48, %p49
      %p52 = scmp.ne.s32.totalorder %s35, %s51
      %p53 = scmp.eq.s32.totalorder %s27, 0
      %p54 = por %p52, %p53
      %s56 = sadd.s32 %s55, 1
      %p59 = scmp.eq.s32.totalorder %s21, 1
      %p60 = scmp.ne.s32.totalorder %s55, %s57
      %p61 = scmp.eq.s32.totalorder %s21, 0
      %p62 = por %p60, %p61
      %p63 = scmp.ne.s32.totalorder %s55, %s57
      %p64 = scmp.eq.s32.totalorder %s26, 1
      %p65 = por %p63, %p64
      %p66 = scmp.ne.s32.totalorder %s57, %s58
      %p67 = scmp.eq.s32.totalorder %s26, 0
      %p68 = por %p66, %p67
      %p69 = scmp.ne.s32.totalorder %s57, %s58
      %p70 = scmp.eq.s32.totalorder %s27, 1
      %p71 = por %p69, %p70
      %p73 = scmp.ne.s32.totalorder %s58, %s72
      %p74 = scmp.eq.s32.totalorder %s27, 0
      %p75 = por %p73, %p74
      %s77 = sadd.s32 %s76, 1
      %p80 = scmp.eq.s32.totalorder %s21, 1
      %p81 = scmp.ne.s32.totalorder %s76, %s78
      %p82 = scmp.eq.s32.totalorder %s21, 0
      %p83 = por %p81, %p82
      %p84 = scmp.ne.s32.totalorder %s76, %s78
      %p85 = scmp.eq.s32.totalorder %s26, 1
      %p86 = por %p84, %p85
      %p87 = scmp.ne.s32.totalorder %s78, %s79
      %p88 = scmp.eq.s32.totalorder %s26, 0
      %p89 = por %p87, %p88
      %p90 = scmp.ne.s32.totalorder %s78, %s79
      %p91 = scmp.eq.s32.totalorder %s27, 1
      %p92 = por %p90, %p91
      %p94 = scmp.ne.s32.totalorder %s79, %s93
      %p95 = scmp.eq.s32.totalorder %s27, 0
      %p96 = por %p94, %p95
      %s98 = sadd.s32 %s97, 1
      %p101 = scmp.eq.s32.totalorder %s21, 1
      %p102 = scmp.ne.s32.totalorder %s97, %s99
      %p103 = scmp.eq.s32.totalorder %s21, 0
      %p104 = por %p102, %p103
      %p105 = scmp.ne.s32.totalorder %s97, %s99
      %p106 = scmp.eq.s32.totalorder %s26, 1
      %p107 = por %p105, %p106
      %p108 = scmp.ne.s32.totalorder %s99, %s100
      %p109 = scmp.eq.s32.totalorder %s26, 0
      %p110 = por %p108, %p109
      %p111 = scmp.ne.s32.totalorder %s99, %s100
      %p112 = scmp.eq.s32.totalorder %s27, 1
      %p113 = por %p111, %p112
      %p115 = scmp.ne.s32.totalorder %s100, %s114
      %p116 = scmp.eq.s32.totalorder %s27, 0
      %p117 = por %p115, %p116
      %s119 = sadd.s32 %s118, 1
      %p122 = scmp.eq.s32.totalorder %s21, 1
      %p123 = scmp.ne.s32.totalorder %s118, %s120
      %p124 = scmp.eq.s32.totalorder %s21, 0
      %p125 = por %p123, %p124
      %p126 = scmp.ne.s32.totalorder %s118, %s120
      %p127 = scmp.eq.s32.totalorder %s26, 1
      %p128 = por %p126, %p127
      %p129 = scmp.ne.s32.totalorder %s120, %s121
      %p130 = scmp.eq.s32.totalorder %s26, 0
      %p131 = por %p129, %p130
      %p132 = scmp.ne.s32.totalorder %s120, %s121
      %p133 = scmp.eq.s32.totalorder %s27, 1
      %p134 = por %p132, %p133
      %p136 = scmp.ne.s32.totalorder %s121, %s135
      %p137 = scmp.eq.s32.totalorder %s27, 0
      %p138 = por %p136, %p137
      %s140 = sadd.s32 %s139, 1
      %p143 = scmp.eq.s32.totalorder %s21, 1
      %p144 = scmp.ne.s32.totalorder %s139, %s141
      %p145 = scmp.eq.s32.totalorder %s21, 0
      %p146 = por %p144, %p145
      %p147 = scmp.ne.s32.totalorder %s139, %s141
      %p148 = scmp.eq.s32.totalorder %s26, 1
      %p149 = por %p147, %p148
      %p150 = scmp.ne.s32.totalorder %s141, %s142
      %p151 = scmp.eq.s32.totalorder %s26, 0
      %p152 = por %p150, %p151
      %p153 = scmp.ne.s32.totalorder %s141, %s142
      %p154 = scmp.eq.s32.totalorder %s27, 1
      %p155 = por %p153, %p154
      %p157 = scmp.ne.s32.totalorder %s142, %s156
      %p158 = scmp.eq.s32.totalorder %s27, 0
      %p159 = por %p157, %p158
      %s161 = sadd.s32 %s160, 1
      %p164 = scmp.eq.s32.totalorder %s21, 1
      %p165 = scmp.ne.s32.totalorder %s160, %s162
      %p166 = scmp.eq.s32.totalorder %s21, 0
      %p167 = por %p165, %p166
      %p168 = scmp.ne.s32.totalorder %s160, %s162
      %p169 = scmp.eq.s32.totalorder %s26, 1
      %p170 = por %p168, %p169
      %p171 = scmp.ne.s32.totalorder %s162, %s163
      %p172 = scmp.eq.s32.totalorder %s26, 0
      %p173 = por %p171, %p172
      %p174 = scmp.ne.s32.totalorder %s162, %s163
      %p175 = scmp.eq.s32.totalorder %s27, 1
      %p176 = por %p174, %p175
      %p178 = scmp.ne.s32.totalorder %s163, %s177
      %p179 = scmp.eq.s32.totalorder %s27, 0
      %p180 = por %p178, %p179
      %s181 = ssub.s32 %s21, %s28
      %p182 = scmp.eq.s32.totalorder %s181, 0
      %s184 = sadd.s32 %s183, 1
      %s185 = scalar_select %p182, %s183, %s184
      %p188 = pneg %p182
      %p189 = scmp.eq.s32.totalorder %s21, 1
      %p190 = por %p188, %p189
      %p191 = scmp.ne.s32.totalorder %s183, %s186
      %p192 = scmp.eq.s32.totalorder %s21, 0
      %p193 = por %p191, %p192
      %p194 = scmp.ne.s32.totalorder %s183, %s186
      %p195 = scmp.eq.s32.totalorder %s26, 1
      %p196 = por %p194, %p195
      %p197 = scmp.ne.s32.totalorder %s186, %s187
      %p198 = scmp.eq.s32.totalorder %s26, 0
      %p199 = por %p197, %p198
      %p200 = scmp.ne.s32.totalorder %s186, %s187
      %p201 = scmp.eq.s32.totalorder %s27, 1
      %p202 = por %p200, %p201
      %p204 = scmp.ne.s32.totalorder %s187, %s203
      %p205 = scmp.eq.s32.totalorder %s27, 0
      %p206 = por %p204, %p205
      %p207 = scmp.le.s32.totalorder 1, %s21
      %p208 = scmp.lt.s32.totalorder %s21, 3
      %p209 = pnand %p207, %p208
      %p210 = pneg %p209
      // Predicated region
      $region9: #{tpu_custom_call.1} parent=5 // pred_check
        _
      $region10: #{tpu_custom_call.1} parent=5 // pred_check_branch
        %212 = sbr.rel (%p209) target = $region12
      $region11: #{tpu_custom_call.1} parent=5 // pred_region
        %s213 = ssub.s32 %s21, 1
        // Predicated region
        $region13: #{tpu_custom_call.1} parent=11 // pred_check
          %p214 = pneg %p68
        $region14: #{tpu_custom_call.1} parent=11 // pred_check_branch
          %216 = sbr.rel (%p214) target = $region16
        $region15: #{tpu_custom_call.1} parent=11 // pred_region
          %s218 = ssub.s32 1024, 1024
          %219 = vsyncadd [#allocation6], %s218
          %s220 = sshll.u32 [#allocation5], 4
          %s221 = int_to_ptr.vmem [resolvable:$true] %s220
          %226 = dma.hbm_to_vmem [thread:$0]  %s1, 1024, %s221, [#allocation6], 64, 64, 4
        $region16: #{tpu_custom_call.1} parent=11 // pred_fallthru
          _
        // Predicated region
        $region17: #{tpu_custom_call.1} parent=11 // pred_check
          %p227 = pneg %p89
        $region18: #{tpu_custom_call.1} parent=11 // pred_check_branch
          %229 = sbr.rel (%p227) target = $region20
        $region19: #{tpu_custom_call.1} parent=11 // pred_region
          _
        $region20: #{tpu_custom_call.1} parent=11 // pred_fallthru
          _
        // Predicated region
        $region21: #{tpu_custom_call.1} parent=11 // pred_check
          %p230 = pneg %p110
        $region22: #{tpu_custom_call.1} parent=11 // pred_check_branch
          %232 = sbr.rel (%p230) target = $region24
        $region23: #{tpu_custom_call.1} parent=11 // pred_region
          %s234 = ssub.s32 1024, 1024
          %235 = vsyncadd [#allocation6], %s234
          %s236 = sshll.u32 [#allocation7], 4
          %s237 = int_to_ptr.vmem [resolvable:$true] %s236
          %242 = dma.hbm_to_vmem [thread:$0]  %s3, 1024, %s237, [#allocation6], 64, 64, 4
        $region24: #{tpu_custom_call.1} parent=11 // pred_fallthru
          _
        // Predicated region
        $region25: #{tpu_custom_call.1} parent=11 // pred_check
          %p243 = pneg %p131
        $region26: #{tpu_custom_call.1} parent=11 // pred_check_branch
          %245 = sbr.rel (%p243) target = $region28
        $region27: #{tpu_custom_call.1} parent=11 // pred_region
          _
        $region28: #{tpu_custom_call.1} parent=11 // pred_fallthru
          _
        // Predicated region
        $region29: #{tpu_custom_call.1} parent=11 // pred_check
          %p246 = pneg %p152
        $region30: #{tpu_custom_call.1} parent=11 // pred_check_branch
          %248 = sbr.rel (%p246) target = $region32
        $region31: #{tpu_custom_call.1} parent=11 // pred_region
          %s250 = ssub.s32 1024, 1024
          %251 = vsyncadd [#allocation9], %s250
          %s252 = sshll.u32 [#allocation8], 4
          %s253 = int_to_ptr.vmem [resolvable:$true] %s252
          %258 = dma.hbm_to_vmem [thread:$0]  %s5, 1024, %s253, [#allocation9], 64, 64, 4
        $region32: #{tpu_custom_call.1} parent=11 // pred_fallthru
          _
        // Predicated region
        $region33: #{tpu_custom_call.1} parent=11 // pred_check
          %p259 = pneg %p173
        $region34: #{tpu_custom_call.1} parent=11 // pred_check_branch
          %261 = sbr.rel (%p259) target = $region36
        $region35: #{tpu_custom_call.1} parent=11 // pred_region
          _
        $region36: #{tpu_custom_call.1} parent=11 // pred_fallthru
          _
      $region12: #{tpu_custom_call.1} parent=5 // pred_fallthru
        _
      %p262 = scmp.lt.s32.totalorder %s21, 2
      // Predicated region
      $region37: #{tpu_custom_call.1} parent=5 // pred_check
        %p263 = pneg %p262
      $region38: #{tpu_custom_call.1} parent=5 // pred_check_branch
        %265 = sbr.rel (%p263) target = $region40
      $region39: #{tpu_custom_call.1} parent=5 // pred_region
        // Predicated region
        $region41: #{tpu_custom_call.1} parent=39 // pred_check
          %p266 = pneg %p41
        $region42: #{tpu_custom_call.1} parent=39 // pred_check_branch
          %268 = sbr.rel (%p266) target = $region44
        $region43: #{tpu_custom_call.1} parent=39 // pred_region
          %s269 = sand.u32 %s31, 1
          %s270 = scalar_lea.sflag [#allocation3], %s269
          %s271 = sand.u32 %s31, 1
          %s272 = smul.addr %s271, 304
          %s273 = scalar_lea.vmem [#allocation2], %s272
          %s274 = smul.u32 38, %s21
          %s275 = ssub.s32 75, %s274
          %p276 = scmp.lt.s32.totalorder %s275, 38
          %s277 = scalar_select %p276, %s275, 38
          %s278 = smul.u32 128, %s277
          %s280 = ssub.s32 4864, %s278
          %281 = vsyncadd %s270, %s280
          %p282 = scmp.ne.s32.totalorder 0, %s278
          %s283 = smul.addr %s274, 128
          %s284 = scalar_lea.hbm %s0, %s283
          %s285 = smul.u32 8, %s277
          %s286 = sshll.u32 %s273, 4
          %s287 = int_to_ptr.vmem [resolvable:$true] %s286
          %s288 = sshll.u32 %s285, 4
          %292 = dma.hbm_to_vmem [thread:$0]  (%p282), %s284, %s288, %s287, %s270, 128, 128, 8
        $region44: #{tpu_custom_call.1} parent=39 // pred_fallthru
          _
      $region40: #{tpu_custom_call.1} parent=5 // pred_fallthru
        _
      %p293 = scmp.le.s32.totalorder 1, %s21
      %p294 = scmp.lt.s32.totalorder %s21, 3
      %p295 = pnand %p293, %p294
      %p296 = pneg %p295
      // Predicated region
      $region45: #{tpu_custom_call.1} parent=5 // pred_check
        _
      $region46: #{tpu_custom_call.1} parent=5 // pred_check_branch
        %298 = sbr.rel (%p295) target = $region48
      $region47: #{tpu_custom_call.1} parent=5 // pred_region
        %s299 = ssub.s32 %s21, 1
        %s300 = sand.u32 %s34, 1
        %s301 = scalar_lea.sflag [#allocation3], %s300
        %s302 = sand.u32 %s34, 1
        %s303 = smul.addr %s302, 304
        %s304 = scalar_lea.vmem [#allocation2], %s303
        // Predicated region
        $region49: #{tpu_custom_call.1} parent=47 // pred_check
          %p305 = pneg %p47
        $region50: #{tpu_custom_call.1} parent=47 // pred_check_branch
          %307 = sbr.rel (%p305) target = $region52
        $region51: #{tpu_custom_call.1} parent=47 // pred_region
          %308 = dma.done %s301, 4864
        $region52: #{tpu_custom_call.1} parent=47 // pred_fallthru
          _
        // Predicated region
        $region53: #{tpu_custom_call.1} parent=47 // pred_check
          %p309 = pneg %p68
        $region54: #{tpu_custom_call.1} parent=47 // pred_check_branch
          %311 = sbr.rel (%p309) target = $region56
        $region55: #{tpu_custom_call.1} parent=47 // pred_region
          %312 = dma.done [#allocation6], 1024
        $region56: #{tpu_custom_call.1} parent=47 // pred_fallthru
          _
        // Predicated region
        $region57: #{tpu_custom_call.1} parent=47 // pred_check
          %p313 = pneg %p110
        $region58: #{tpu_custom_call.1} parent=47 // pred_check_branch
          %315 = sbr.rel (%p313) target = $region60
        $region59: #{tpu_custom_call.1} parent=47 // pred_region
          %316 = dma.done [#allocation6], 1024
        $region60: #{tpu_custom_call.1} parent=47 // pred_fallthru
          _
        // Predicated region
        $region61: #{tpu_custom_call.1} parent=47 // pred_check
          %p317 = pneg %p152
        $region62: #{tpu_custom_call.1} parent=47 // pred_check_branch
          %319 = sbr.rel (%p317) target = $region64
        $region63: #{tpu_custom_call.1} parent=47 // pred_region
          %320 = dma.done [#allocation9], 1024
        $region64: #{tpu_custom_call.1} parent=47 // pred_fallthru
          _
        %s321 = sand.u32 %s34, 1
        %s322 = scalar_lea.sflag [#allocation3], %s321
        %s323 = sand.u32 %s34, 1
        %s324 = smul.addr %s323, 304
        %s325 = scalar_lea.vmem [#allocation2], %s324
        %p326 = pneg %p47
        %p327 = pneg %p44
        %p328 = pneg %p68
        %p329 = pneg %p65
        %p330 = pneg %p89
        %p331 = pneg %p86
        %p332 = pneg %p110
        %p333 = pneg %p107
        %p334 = pneg %p131
        %p335 = pneg %p128
        %p336 = pneg %p152
        %p337 = pneg %p149
        %p338 = pneg %p173
        %p339 = pneg %p170
        %p340 = pneg %p199
        %p341 = pneg %p196
        %s342 = sand.u32 %s186, 1
        %s343 = scalar_lea.sflag [#allocation4], %s342
        %s344 = sand.u32 %s186, 1
        %s345 = smul.addr %s344, 152
        %s346 = scalar_lea.vmem [#allocation10], %s345
        %s347 = smul.u32 38, %s26
        %s348 = ssub.s32 75, %s347
        %p349 = scmp.lt.s32.totalorder %s348, 38
        %s350 = scalar_select %p349, %s348, 38
        %s351 = smul.u32 128, %s350
        %s352 = smul.u32 38, %s26
        %s353 = ssub.s32 75, %s352
        %p354 = scmp.lt.s32.totalorder %s353, 38
        %s355 = scalar_select %p354, %s353, 38
        %s356 = smul.u32 64, %s355
        %v358 = vld [vmem:[%s304] sm:$0xff]
        %v359 = vld [vmem:[%s304 + $0x8] sm:$0xff]
        %v360 = vld [vmem:[%s304 + $0x10] sm:$0xff]
        %v361 = vld [vmem:[%s304 + $0x18] sm:$0xff]
        %v362 = vld [vmem:[%s304 + $0x20] sm:$0xff]
        %v363 = vld [vmem:[%s304 + $0x28] sm:$0xff]
        %v364 = vld [vmem:[%s304 + $0x30] sm:$0xff]
        %v365 = vld [vmem:[%s304 + $0x38] sm:$0xff]
        %v366 = vld [vmem:[%s304 + $0x40] sm:$0xff]
        %v367 = vld [vmem:[%s304 + $0x48] sm:$0xff]
        %v368 = vld [vmem:[%s304 + $0x50] sm:$0xff]
        %v369 = vld [vmem:[%s304 + $0x58] sm:$0xff]
        %v370 = vld [vmem:[%s304 + $0x60] sm:$0xff]
        %v371 = vld [vmem:[%s304 + $0x68] sm:$0xff]
        %v372 = vld [vmem:[%s304 + $0x70] sm:$0xff]
        %v373 = vld [vmem:[%s304 + $0x78] sm:$0xff]
        %v374 = vld [vmem:[%s304 + $0x80] sm:$0xff]
        %v375 = vld [vmem:[%s304 + $0x88] sm:$0xff]
        %v376 = vld [vmem:[%s304 + $0x90] sm:$0xff]
        %v377 = vld [vmem:[%s304 + $0x98] sm:$0xff]
        %v378 = vld [vmem:[%s304 + $0xa0] sm:$0xff]
        %v379 = vld [vmem:[%s304 + $0xa8] sm:$0xff]
        %v380 = vld [vmem:[%s304 + $0xb0] sm:$0xff]
        %v381 = vld [vmem:[%s304 + $0xb8] sm:$0xff]
        %v382 = vld [vmem:[%s304 + $0xc0] sm:$0xff]
        %v383 = vld [vmem:[%s304 + $0xc8] sm:$0xff]
        %v384 = vld [vmem:[%s304 + $0xd0] sm:$0xff]
        %v385 = vld [vmem:[%s304 + $0xd8] sm:$0xff]
        %v386 = vld [vmem:[%s304 + $0xe0] sm:$0xff]
        %v387 = vld [vmem:[%s304 + $0xe8] sm:$0xff]
        %v388 = vld [vmem:[%s304 + $0xf0] sm:$0xff]
        %v389 = vld [vmem:[%s304 + $0xf8] sm:$0xff]
        %v390 = vld [vmem:[%s304 + $0x100] sm:$0xff]
        %v391 = vld [vmem:[%s304 + $0x108] sm:$0xff]
        %v392 = vld [vmem:[%s304 + $0x110] sm:$0xff]
        %v393 = vld [vmem:[%s304 + $0x118] sm:$0xff]
        %v394 = vld [vmem:[%s304 + $0x120] sm:$0xff]
        %v395 = vld [vmem:[%s304 + $0x128] sm:$0xff]
        %v396 = vpack.c.bf16 %v359, %v358
        %v397 = vpack.c.bf16 %v361, %v360
        %v398 = vpack.c.bf16 %v363, %v362
        %v399 = vpack.c.bf16 %v365, %v364
        %v400 = vpack.c.bf16 %v367, %v366
        %v401 = vpack.c.bf16 %v369, %v368
        %v402 = vpack.c.bf16 %v371, %v370
        %v403 = vpack.c.bf16 %v373, %v372
        %v404 = vpack.c.bf16 %v375, %v374
        %v405 = vpack.c.bf16 %v377, %v376
        %v406 = vpack.c.bf16 %v379, %v378
        %v407 = vpack.c.bf16 %v381, %v380
        %v408 = vpack.c.bf16 %v383, %v382
        %v409 = vpack.c.bf16 %v385, %v384
        %v410 = vpack.c.bf16 %v387, %v386
        %v411 = vpack.c.bf16 %v389, %v388
        %v412 = vpack.c.bf16 %v391, %v390
        %v413 = vpack.c.bf16 %v393, %v392
        %v414 = vpack.c.bf16 %v395, %v394
        %v415 = vld [vmem:[#allocation5] sm:$0xf]
        %v416 = vld [vmem:[#allocation5 + $0x4] sm:$0xf]
        %v417 = vld [vmem:[#allocation5 + $0x8] sm:$0xf]
        %v418 = vld [vmem:[#allocation5 + $0xc] sm:$0xf]
        %v419 = vld [vmem:[#allocation5 + $0x10] sm:$0xf]
        %v420 = vld [vmem:[#allocation5 + $0x14] sm:$0xf]
        %v421 = vld [vmem:[#allocation5 + $0x18] sm:$0xf]
        %v422 = vld [vmem:[#allocation5 + $0x1c] sm:$0xf]
        %v423 = vld [vmem:[#allocation5 + $0x20] sm:$0xf]
        %v424 = vld [vmem:[#allocation5 + $0x24] sm:$0xf]
        %v425 = vld [vmem:[#allocation5 + $0x28] sm:$0xf]
        %v426 = vld [vmem:[#allocation5 + $0x2c] sm:$0xf]
        %v427 = vld [vmem:[#allocation5 + $0x30] sm:$0xf]
        %v428 = vld [vmem:[#allocation5 + $0x34] sm:$0xf]
        %v429 = vld [vmem:[#allocation5 + $0x38] sm:$0xf]
        %v430 = vld [vmem:[#allocation5 + $0x3c] sm:$0xf]
        %v431 = vld [vmem:[%s2] sm:$0x1]
        %v433 = vlaneseq
        %v434 = vshrl.u32 %v433, 7
        %v435 = vsub.s32 0, %v434
        %v436 = vrot.slane %v431, %v435
        %v454 = vunpack.c.l.b16 %v415
        %v455 = vunpack.c.l.b16 %v416
        %v456 = vunpack.c.l.b16 %v417
        %v457 = vunpack.c.l.b16 %v418
        %v458 = vunpack.c.l.b16 %v419
        %v459 = vunpack.c.l.b16 %v420
        %v460 = vunpack.c.l.b16 %v421
        %v461 = vunpack.c.l.b16 %v422
        %v462 = vunpack.c.l.b16 %v423
        %v463 = vunpack.c.l.b16 %v424
        %v464 = vunpack.c.l.b16 %v425
        %v465 = vunpack.c.l.b16 %v426
        %v466 = vunpack.c.l.b16 %v427
        %v467 = vunpack.c.l.b16 %v428
        %v468 = vunpack.c.l.b16 %v429
        %v469 = vunpack.c.l.b16 %v430
        %v470 = vpack.c.b16 %v455, %v454
        %v471 = vpack.c.b16 %v457, %v456
        %v472 = vpack.c.b16 %v459, %v458
        %v473 = vpack.c.b16 %v461, %v460
        %v474 = vpack.c.b16 %v463, %v462
        %v475 = vpack.c.b16 %v465, %v464
        %v476 = vpack.c.b16 %v467, %v466
        %v477 = vpack.c.b16 %v469, %v468
        %486 = vmatprep.subr.bf16.mxu0 0
        %487 = vmatpush1.bf16.msra.mxu0 %v477
        %488 = vmatprep.subr.bf16.mxu0 0
        %489 = vmatpush1.bf16.msra.mxu0 %v476
        %490 = vmatprep.subr.bf16.mxu0 0
        %491 = vmatpush1.bf16.msra.mxu0 %v475
        %492 = vmatprep.subr.bf16.mxu0 0
        %493 = vmatpush1.bf16.msra.mxu0 %v474
        %494 = vmatprep.subr.bf16.mxu0 0
        %495 = vmatpush1.bf16.msra.mxu0 %v473
        %496 = vmatprep.subr.bf16.mxu0 0
        %497 = vmatpush1.bf16.msra.mxu0 %v472
        %498 = vmatprep.subr.bf16.mxu0 0
        %499 = vmatpush1.bf16.msra.mxu0 %v471
        %500 = vmatprep.subr.bf16.mxu0 0
        %501 = vmatpush1.bf16.msra.mxu0 %v470
        %502 = vmatprep.subr.bf16.mxu0 0
        %503 = vmatpush2.bf16.msra.mxu0 0
        %504 = vmatprep.subr.bf16.mxu0 0
        %505 = vmatpush2.bf16.msra.mxu0 0
        %506 = vmatprep.subr.bf16.mxu0 0
        %507 = vmatpush2.bf16.msra.mxu0 0
        %508 = vmatprep.subr.bf16.mxu0 0
        %509 = vmatpush2.bf16.msra.mxu0 0
        %510 = vmatprep.subr.bf16.mxu0 0
        %511 = vmatpush2.bf16.msra.mxu0 0
        %512 = vmatprep.subr.bf16.mxu0 0
        %513 = vmatpush2.bf16.msra.mxu0 0
        %514 = vmatprep.subr.bf16.mxu0 0
        %515 = vmatpush2.bf16.msra.mxu0 0
        %516 = vmatprep.subr.bf16.mxu0 0
        %517 = vmatpush2.bf16.msra.mxu0 0
        %518 = vmatprep.mubr.bf16.mxu0 0
        %519 = vmatmul.mubr.bf16.gmra.mxu0 %v396
        %v520 = vpop.f32.mrf.mxu0
        %v521 = vadd.f32 %v436, %v520
        %v522 = vpop.f32.mrf.mxu0
        %v523 = vpop.f32.mrf.mxu0
        %v524 = vadd.f32 %v436, %v523
        %v525 = vpop.f32.mrf.mxu0
        %526 = vmatprep.mubr.bf16.mxu0 0
        %527 = vmatmul.mubr.bf16.gmra.mxu0 %v397
        %v528 = vpop.f32.mrf.mxu0
        %v529 = vadd.f32 %v436, %v528
        %v530 = vpop.f32.mrf.mxu0
        %v531 = vpop.f32.mrf.mxu0
        %v532 = vadd.f32 %v436, %v531
        %v533 = vpop.f32.mrf.mxu0
        %534 = vmatprep.mubr.bf16.mxu0 0
        %535 = vmatmul.mubr.bf16.gmra.mxu0 %v398
        %v536 = vpop.f32.mrf.mxu0
        %v537 = vadd.f32 %v436, %v536
        %v538 = vpop.f32.mrf.mxu0
        %v539 = vpop.f32.mrf.mxu0
        %v540 = vadd.f32 %v436, %v539
        %v541 = vpop.f32.mrf.mxu0
        %542 = vmatprep.mubr.bf16.mxu0 0
        %543 = vmatmul.mubr.bf16.gmra.mxu0 %v399
        %v544 = vpop.f32.mrf.mxu0
        %v545 = vadd.f32 %v436, %v544
        %v546 = vpop.f32.mrf.mxu0
        %v547 = vpop.f32.mrf.mxu0
        %v548 = vadd.f32 %v436, %v547
        %v549 = vpop.f32.mrf.mxu0
        %550 = vmatprep.mubr.bf16.mxu0 0
        %551 = vmatmul.mubr.bf16.gmra.mxu0 %v400
        %v552 = vpop.f32.mrf.mxu0
        %v553 = vadd.f32 %v436, %v552
        %v554 = vpop.f32.mrf.mxu0
        %v555 = vpop.f32.mrf.mxu0
        %v556 = vadd.f32 %v436, %v555
        %v557 = vpop.f32.mrf.mxu0
        %558 = vmatprep.mubr.bf16.mxu0 0
        %559 = vmatmul.mubr.bf16.gmra.mxu0 %v401
        %v560 = vpop.f32.mrf.mxu0
        %v561 = vadd.f32 %v436, %v560
        %v562 = vpop.f32.mrf.mxu0
        %v563 = vpop.f32.mrf.mxu0
        %v564 = vadd.f32 %v436, %v563
        %v565 = vpop.f32.mrf.mxu0
        %566 = vmatprep.mubr.bf16.mxu0 0
        %567 = vmatmul.mubr.bf16.gmra.mxu0 %v402
        %v568 = vpop.f32.mrf.mxu0
        %v569 = vadd.f32 %v436, %v568
        %v570 = vpop.f32.mrf.mxu0
        %v571 = vpop.f32.mrf.mxu0
        %v572 = vadd.f32 %v436, %v571
        %v573 = vpop.f32.mrf.mxu0
        %574 = vmatprep.mubr.bf16.mxu0 0
        %575 = vmatmul.mubr.bf16.gmra.mxu0 %v403
        %v576 = vpop.f32.mrf.mxu0
        %v577 = vadd.f32 %v436, %v576
        %v578 = vpop.f32.mrf.mxu0
        %v579 = vpop.f32.mrf.mxu0
        %v580 = vadd.f32 %v436, %v579
        %v581 = vpop.f32.mrf.mxu0
        %582 = vmatprep.mubr.bf16.mxu0 0
        %583 = vmatmul.mubr.bf16.gmra.mxu0 %v404
        %v584 = vpop.f32.mrf.mxu0
        %v585 = vadd.f32 %v436, %v584
        %v586 = vpop.f32.mrf.mxu0
        %v587 = vpop.f32.mrf.mxu0
        %v588 = vadd.f32 %v436, %v587
        %v589 = vpop.f32.mrf.mxu0
        %590 = vmatprep.mubr.bf16.mxu0 0
        %591 = vmatmul.mubr.bf16.gmra.mxu0 %v405
        %v592 = vpop.f32.mrf.mxu0
        %v593 = vadd.f32 %v436, %v592
        %v594 = vpop.f32.mrf.mxu0
        %v595 = vpop.f32.mrf.mxu0
        %v596 = vadd.f32 %v436, %v595
        %v597 = vpop.f32.mrf.mxu0
        %598 = vmatprep.mubr.bf16.mxu0 0
        %599 = vmatmul.mubr.bf16.gmra.mxu0 %v406
        %v600 = vpop.f32.mrf.mxu0
        %v601 = vadd.f32 %v436, %v600
        %v602 = vpop.f32.mrf.mxu0
        %v603 = vpop.f32.mrf.mxu0
        %v604 = vadd.f32 %v436, %v603
        %v605 = vpop.f32.mrf.mxu0
        %606 = vmatprep.mubr.bf16.mxu0 0
        %607 = vmatmul.mubr.bf16.gmra.mxu0 %v407
        %v608 = vpop.f32.mrf.mxu0
        %v609 = vadd.f32 %v436, %v608
        %v610 = vpop.f32.mrf.mxu0
        %v611 = vpop.f32.mrf.mxu0
        %v612 = vadd.f32 %v436, %v611
        %v613 = vpop.f32.mrf.mxu0
        %614 = vmatprep.mubr.bf16.mxu0 0
        %615 = vmatmul.mubr.bf16.gmra.mxu0 %v408
        %v616 = vpop.f32.mrf.mxu0
        %v617 = vadd.f32 %v436, %v616
        %v618 = vpop.f32.mrf.mxu0
        %v619 = vpop.f32.mrf.mxu0
        %v620 = vadd.f32 %v436, %v619
        %v621 = vpop.f32.mrf.mxu0
        %622 = vmatprep.mubr.bf16.mxu0 0
        %623 = vmatmul.mubr.bf16.gmra.mxu0 %v409
        %v624 = vpop.f32.mrf.mxu0
        %v625 = vadd.f32 %v436, %v624
        %v626 = vpop.f32.mrf.mxu0
        %v627 = vpop.f32.mrf.mxu0
        %v628 = vadd.f32 %v436, %v627
        %v629 = vpop.f32.mrf.mxu0
        %630 = vmatprep.mubr.bf16.mxu0 0
        %631 = vmatmul.mubr.bf16.gmra.mxu0 %v410
        %v632 = vpop.f32.mrf.mxu0
        %v633 = vadd.f32 %v436, %v632
        %v634 = vpop.f32.mrf.mxu0
        %v635 = vpop.f32.mrf.mxu0
        %v636 = vadd.f32 %v436, %v635
        %v637 = vpop.f32.mrf.mxu0
        %638 = vmatprep.mubr.bf16.mxu0 0
        %639 = vmatmul.mubr.bf16.gmra.mxu0 %v411
        %v640 = vpop.f32.mrf.mxu0
        %v641 = vadd.f32 %v436, %v640
        %v642 = vpop.f32.mrf.mxu0
        %v643 = vpop.f32.mrf.mxu0
        %v644 = vadd.f32 %v436, %v643
        %v645 = vpop.f32.mrf.mxu0
        %646 = vmatprep.mubr.bf16.mxu0 0
        %647 = vmatmul.mubr.bf16.gmra.mxu0 %v412
        %v648 = vpop.f32.mrf.mxu0
        %v649 = vadd.f32 %v436, %v648
        %v650 = vpop.f32.mrf.mxu0
        %v651 = vpop.f32.mrf.mxu0
        %v652 = vadd.f32 %v436, %v651
        %v653 = vpop.f32.mrf.mxu0
        %654 = vmatprep.mubr.bf16.mxu0 0
        %655 = vmatmul.mubr.bf16.gmra.mxu0 %v413
        %v656 = vpop.f32.mrf.mxu0
        %v657 = vadd.f32 %v436, %v656
        %v658 = vpop.f32.mrf.mxu0
        %v659 = vpop.f32.mrf.mxu0
        %v660 = vadd.f32 %v436, %v659
        %v661 = vpop.f32.mrf.mxu0
        %662 = vmatprep.mubr.bf16.mxu0 0
        %663 = vmatmul.mubr.bf16.gmra.mxu0 %v414
        %v664 = vpop.f32.mrf.mxu0
        %v665 = vadd.f32 %v436, %v664
        %v666 = vpop.f32.mrf.mxu0
        %v667 = vpop.f32.mrf.mxu0
        %v668 = vadd.f32 %v436, %v667
        %v669 = vpop.f32.mrf.mxu0
        %670 = vdwg.mxu0
        %v671 = vmax.f32 %v521, 0.0
        %v672 = vmax.f32 %v524, 0.0
        %v673 = vmax.f32 %v529, 0.0
        %v674 = vmax.f32 %v532, 0.0
        %v675 = vmax.f32 %v537, 0.0
        %v676 = vmax.f32 %v540, 0.0
        %v677 = vmax.f32 %v545, 0.0
        %v678 = vmax.f32 %v548, 0.0
        %v679 = vmax.f32 %v553, 0.0
        %v680 = vmax.f32 %v556, 0.0
        %v681 = vmax.f32 %v561, 0.0
        %v682 = vmax.f32 %v564, 0.0
        %v683 = vmax.f32 %v569, 0.0
        %v684 = vmax.f32 %v572, 0.0
        %v685 = vmax.f32 %v577, 0.0
        %v686 = vmax.f32 %v580, 0.0
        %v687 = vmax.f32 %v585, 0.0
        %v688 = vmax.f32 %v588, 0.0
        %v689 = vmax.f32 %v593, 0.0
        %v690 = vmax.f32 %v596, 0.0
        %v691 = vmax.f32 %v601, 0.0
        %v692 = vmax.f32 %v604, 0.0
        %v693 = vmax.f32 %v609, 0.0
        %v694 = vmax.f32 %v612, 0.0
        %v695 = vmax.f32 %v617, 0.0
        %v696 = vmax.f32 %v620, 0.0
        %v697 = vmax.f32 %v625, 0.0
        %v698 = vmax.f32 %v628, 0.0
        %v699 = vmax.f32 %v633, 0.0
        %v700 = vmax.f32 %v636, 0.0
        %v701 = vmax.f32 %v641, 0.0
        %v702 = vmax.f32 %v644, 0.0
        %v703 = vmax.f32 %v649, 0.0
        %v704 = vmax.f32 %v652, 0.0
        %v705 = vmax.f32 %v657, 0.0
        %v706 = vmax.f32 %v660, 0.0
        %v707 = vmax.f32 %v665, 0.0
        %v708 = vmax.f32 %v668, 0.0
        %v709 = vpack.c.bf16 %v672, %v671
        %v710 = vpack.c.bf16 %v674, %v673
        %v711 = vpack.c.bf16 %v676, %v675
        %v712 = vpack.c.bf16 %v678, %v677
        %v713 = vpack.c.bf16 %v680, %v679
        %v714 = vpack.c.bf16 %v682, %v681
        %v715 = vpack.c.bf16 %v684, %v683
        %v716 = vpack.c.bf16 %v686, %v685
        %v717 = vpack.c.bf16 %v688, %v687
        %v718 = vpack.c.bf16 %v690, %v689
        %v719 = vpack.c.bf16 %v692, %v691
        %v720 = vpack.c.bf16 %v694, %v693
        %v721 = vpack.c.bf16 %v696, %v695
        %v722 = vpack.c.bf16 %v698, %v697
        %v723 = vpack.c.bf16 %v700, %v699
        %v724 = vpack.c.bf16 %v702, %v701
        %v725 = vpack.c.bf16 %v704, %v703
        %v726 = vpack.c.bf16 %v706, %v705
        %v727 = vpack.c.bf16 %v708, %v707
        %v728 = vld [vmem:[#allocation7] sm:$0xf]
        %v729 = vld [vmem:[#allocation7 + $0x4] sm:$0xf]
        %v730 = vld [vmem:[#allocation7 + $0x8] sm:$0xf]
        %v731 = vld [vmem:[#allocation7 + $0xc] sm:$0xf]
        %v732 = vld [vmem:[#allocation7 + $0x10] sm:$0xf]
        %v733 = vld [vmem:[#allocation7 + $0x14] sm:$0xf]
        %v734 = vld [vmem:[#allocation7 + $0x18] sm:$0xf]
        %v735 = vld [vmem:[#allocation7 + $0x1c] sm:$0xf]
        %v736 = vld [vmem:[#allocation7 + $0x20] sm:$0xf]
        %v737 = vld [vmem:[#allocation7 + $0x24] sm:$0xf]
        %v738 = vld [vmem:[#allocation7 + $0x28] sm:$0xf]
        %v739 = vld [vmem:[#allocation7 + $0x2c] sm:$0xf]
        %v740 = vld [vmem:[#allocation7 + $0x30] sm:$0xf]
        %v741 = vld [vmem:[#allocation7 + $0x34] sm:$0xf]
        %v742 = vld [vmem:[#allocation7 + $0x38] sm:$0xf]
        %v743 = vld [vmem:[#allocation7 + $0x3c] sm:$0xf]
        %v744 = vld [vmem:[%s4] sm:$0x1]
        %v746 = vlaneseq
        %v747 = vshrl.u32 %v746, 7
        %v748 = vsub.s32 0, %v747
        %v749 = vrot.slane %v744, %v748
        %v767 = vunpack.c.l.b16 %v728
        %v768 = vunpack.c.l.b16 %v729
        %v769 = vunpack.c.l.b16 %v730
        %v770 = vunpack.c.l.b16 %v731
        %v771 = vunpack.c.l.b16 %v732
        %v772 = vunpack.c.l.b16 %v733
        %v773 = vunpack.c.l.b16 %v734
        %v774 = vunpack.c.l.b16 %v735
        %v775 = vunpack.c.l.b16 %v736
        %v776 = vunpack.c.l.b16 %v737
        %v777 = vunpack.c.l.b16 %v738
        %v778 = vunpack.c.l.b16 %v739
        %v779 = vunpack.c.l.b16 %v740
        %v780 = vunpack.c.l.b16 %v741
        %v781 = vunpack.c.l.b16 %v742
        %v782 = vunpack.c.l.b16 %v743
        %v783 = vpack.c.b16 %v768, %v767
        %v784 = vpack.c.b16 %v770, %v769
        %v785 = vpack.c.b16 %v772, %v771
        %v786 = vpack.c.b16 %v774, %v773
        %v787 = vpack.c.b16 %v776, %v775
        %v788 = vpack.c.b16 %v778, %v777
        %v789 = vpack.c.b16 %v780, %v779
        %v790 = vpack.c.b16 %v782, %v781
        %799 = vmatprep.subr.bf16.mxu0 0
        %800 = vmatpush1.bf16.msra.mxu0 %v790
        %801 = vmatprep.subr.bf16.mxu0 0
        %802 = vmatpush1.bf16.msra.mxu0 %v789
        %803 = vmatprep.subr.bf16.mxu0 0
        %804 = vmatpush1.bf16.msra.mxu0 %v788
        %805 = vmatprep.subr.bf16.mxu0 0
        %806 = vmatpush1.bf16.msra.mxu0 %v787
        %807 = vmatprep.subr.bf16.mxu0 0
        %808 = vmatpush1.bf16.msra.mxu0 %v786
        %809 = vmatprep.subr.bf16.mxu0 0
        %810 = vmatpush1.bf16.msra.mxu0 %v785
        %811 = vmatprep.subr.bf16.mxu0 0
        %812 = vmatpush1.bf16.msra.mxu0 %v784
        %813 = vmatprep.subr.bf16.mxu0 0
        %814 = vmatpush1.bf16.msra.mxu0 %v783
        %815 = vmatprep.subr.bf16.mxu0 0
        %816 = vmatpush2.bf16.msra.mxu0 0
        %817 = vmatprep.subr.bf16.mxu0 0
        %818 = vmatpush2.bf16.msra.mxu0 0
        %819 = vmatprep.subr.bf16.mxu0 0
        %820 = vmatpush2.bf16.msra.mxu0 0
        %821 = vmatprep.subr.bf16.mxu0 0
        %822 = vmatpush2.bf16.msra.mxu0 0
        %823 = vmatprep.subr.bf16.mxu0 0
        %824 = vmatpush2.bf16.msra.mxu0 0
        %825 = vmatprep.subr.bf16.mxu0 0
        %826 = vmatpush2.bf16.msra.mxu0 0
        %827 = vmatprep.subr.bf16.mxu0 0
        %828 = vmatpush2.bf16.msra.mxu0 0
        %829 = vmatprep.subr.bf16.mxu0 0
        %830 = vmatpush2.bf16.msra.mxu0 0
        %831 = vmatprep.mubr.bf16.mxu0 0
        %832 = vmatmul.mubr.bf16.gmra.mxu0 %v709
        %v833 = vpop.f32.mrf.mxu0
        %v834 = vadd.f32 %v749, %v833
        %v835 = vpop.f32.mrf.mxu0
        %v836 = vpop.f32.mrf.mxu0
        %v837 = vadd.f32 %v749, %v836
        %v838 = vpop.f32.mrf.mxu0
        %839 = vmatprep.mubr.bf16.mxu0 0
        %840 = vmatmul.mubr.bf16.gmra.mxu0 %v710
        %v841 = vpop.f32.mrf.mxu0
        %v842 = vadd.f32 %v749, %v841
        %v843 = vpop.f32.mrf.mxu0
        %v844 = vpop.f32.mrf.mxu0
        %v845 = vadd.f32 %v749, %v844
        %v846 = vpop.f32.mrf.mxu0
        %847 = vmatprep.mubr.bf16.mxu0 0
        %848 = vmatmul.mubr.bf16.gmra.mxu0 %v711
        %v849 = vpop.f32.mrf.mxu0
        %v850 = vadd.f32 %v749, %v849
        %v851 = vpop.f32.mrf.mxu0
        %v852 = vpop.f32.mrf.mxu0
        %v853 = vadd.f32 %v749, %v852
        %v854 = vpop.f32.mrf.mxu0
        %855 = vmatprep.mubr.bf16.mxu0 0
        %856 = vmatmul.mubr.bf16.gmra.mxu0 %v712
        %v857 = vpop.f32.mrf.mxu0
        %v858 = vadd.f32 %v749, %v857
        %v859 = vpop.f32.mrf.mxu0
        %v860 = vpop.f32.mrf.mxu0
        %v861 = vadd.f32 %v749, %v860
        %v862 = vpop.f32.mrf.mxu0
        %863 = vmatprep.mubr.bf16.mxu0 0
        %864 = vmatmul.mubr.bf16.gmra.mxu0 %v713
        %v865 = vpop.f32.mrf.mxu0
        %v866 = vadd.f32 %v749, %v865
        %v867 = vpop.f32.mrf.mxu0
        %v868 = vpop.f32.mrf.mxu0
        %v869 = vadd.f32 %v749, %v868
        %v870 = vpop.f32.mrf.mxu0
        %871 = vmatprep.mubr.bf16.mxu0 0
        %872 = vmatmul.mubr.bf16.gmra.mxu0 %v714
        %v873 = vpop.f32.mrf.mxu0
        %v874 = vadd.f32 %v749, %v873
        %v875 = vpop.f32.mrf.mxu0
        %v876 = vpop.f32.mrf.mxu0
        %v877 = vadd.f32 %v749, %v876
        %v878 = vpop.f32.mrf.mxu0
        %879 = vmatprep.mubr.bf16.mxu0 0
        %880 = vmatmul.mubr.bf16.gmra.mxu0 %v715
        %v881 = vpop.f32.mrf.mxu0
        %v882 = vadd.f32 %v749, %v881
        %v883 = vpop.f32.mrf.mxu0
        %v884 = vpop.f32.mrf.mxu0
        %v885 = vadd.f32 %v749, %v884
        %v886 = vpop.f32.mrf.mxu0
        %887 = vmatprep.mubr.bf16.mxu0 0
        %888 = vmatmul.mubr.bf16.gmra.mxu0 %v716
        %v889 = vpop.f32.mrf.mxu0
        %v890 = vadd.f32 %v749, %v889
        %v891 = vpop.f32.mrf.mxu0
        %v892 = vpop.f32.mrf.mxu0
        %v893 = vadd.f32 %v749, %v892
        %v894 = vpop.f32.mrf.mxu0
        %895 = vmatprep.mubr.bf16.mxu0 0
        %896 = vmatmul.mubr.bf16.gmra.mxu0 %v717
        %v897 = vpop.f32.mrf.mxu0
        %v898 = vadd.f32 %v749, %v897
        %v899 = vpop.f32.mrf.mxu0
        %v900 = vpop.f32.mrf.mxu0
        %v901 = vadd.f32 %v749, %v900
        %v902 = vpop.f32.mrf.mxu0
        %903 = vmatprep.mubr.bf16.mxu0 0
        %904 = vmatmul.mubr.bf16.gmra.mxu0 %v718
        %v905 = vpop.f32.mrf.mxu0
        %v906 = vadd.f32 %v749, %v905
        %v907 = vpop.f32.mrf.mxu0
        %v908 = vpop.f32.mrf.mxu0
        %v909 = vadd.f32 %v749, %v908
        %v910 = vpop.f32.mrf.mxu0
        %911 = vmatprep.mubr.bf16.mxu0 0
        %912 = vmatmul.mubr.bf16.gmra.mxu0 %v719
        %v913 = vpop.f32.mrf.mxu0
        %v914 = vadd.f32 %v749, %v913
        %v915 = vpop.f32.mrf.mxu0
        %v916 = vpop.f32.mrf.mxu0
        %v917 = vadd.f32 %v749, %v916
        %v918 = vpop.f32.mrf.mxu0
        %919 = vmatprep.mubr.bf16.mxu0 0
        %920 = vmatmul.mubr.bf16.gmra.mxu0 %v720
        %v921 = vpop.f32.mrf.mxu0
        %v922 = vadd.f32 %v749, %v921
        %v923 = vpop.f32.mrf.mxu0
        %v924 = vpop.f32.mrf.mxu0
        %v925 = vadd.f32 %v749, %v924
        %v926 = vpop.f32.mrf.mxu0
        %927 = vmatprep.mubr.bf16.mxu0 0
        %928 = vmatmul.mubr.bf16.gmra.mxu0 %v721
        %v929 = vpop.f32.mrf.mxu0
        %v930 = vadd.f32 %v749, %v929
        %v931 = vpop.f32.mrf.mxu0
        %v932 = vpop.f32.mrf.mxu0
        %v933 = vadd.f32 %v749, %v932
        %v934 = vpop.f32.mrf.mxu0
        %935 = vmatprep.mubr.bf16.mxu0 0
        %936 = vmatmul.mubr.bf16.gmra.mxu0 %v722
        %v937 = vpop.f32.mrf.mxu0
        %v938 = vadd.f32 %v749, %v937
        %v939 = vpop.f32.mrf.mxu0
        %v940 = vpop.f32.mrf.mxu0
        %v941 = vadd.f32 %v749, %v940
        %v942 = vpop.f32.mrf.mxu0
        %943 = vmatprep.mubr.bf16.mxu0 0
        %944 = vmatmul.mubr.bf16.gmra.mxu0 %v723
        %v945 = vpop.f32.mrf.mxu0
        %v946 = vadd.f32 %v749, %v945
        %v947 = vpop.f32.mrf.mxu0
        %v948 = vpop.f32.mrf.mxu0
        %v949 = vadd.f32 %v749, %v948
        %v950 = vpop.f32.mrf.mxu0
        %951 = vmatprep.mubr.bf16.mxu0 0
        %952 = vmatmul.mubr.bf16.gmra.mxu0 %v724
        %v953 = vpop.f32.mrf.mxu0
        %v954 = vadd.f32 %v749, %v953
        %v955 = vpop.f32.mrf.mxu0
        %v956 = vpop.f32.mrf.mxu0
        %v957 = vadd.f32 %v749, %v956
        %v958 = vpop.f32.mrf.mxu0
        %959 = vmatprep.mubr.bf16.mxu0 0
        %960 = vmatmul.mubr.bf16.gmra.mxu0 %v725
        %v961 = vpop.f32.mrf.mxu0
        %v962 = vadd.f32 %v749, %v961
        %v963 = vpop.f32.mrf.mxu0
        %v964 = vpop.f32.mrf.mxu0
        %v965 = vadd.f32 %v749, %v964
        %v966 = vpop.f32.mrf.mxu0
        %967 = vmatprep.mubr.bf16.mxu0 0
        %968 = vmatmul.mubr.bf16.gmra.mxu0 %v726
        %v969 = vpop.f32.mrf.mxu0
        %v970 = vadd.f32 %v749, %v969
        %v971 = vpop.f32.mrf.mxu0
        %v972 = vpop.f32.mrf.mxu0
        %v973 = vadd.f32 %v749, %v972
        %v974 = vpop.f32.mrf.mxu0
        %975 = vmatprep.mubr.bf16.mxu0 0
        %976 = vmatmul.mubr.bf16.gmra.mxu0 %v727
        %v977 = vpop.f32.mrf.mxu0
        %v978 = vadd.f32 %v749, %v977
        %v979 = vpop.f32.mrf.mxu0
        %v980 = vpop.f32.mrf.mxu0
        %v981 = vadd.f32 %v749, %v980
        %v982 = vpop.f32.mrf.mxu0
        %983 = vdwg.mxu0
        %v984 = vmax.f32 %v834, 0.0
        %v985 = vmax.f32 %v837, 0.0
        %v986 = vmax.f32 %v842, 0.0
        %v987 = vmax.f32 %v845, 0.0
        %v988 = vmax.f32 %v850, 0.0
        %v989 = vmax.f32 %v853, 0.0
        %v990 = vmax.f32 %v858, 0.0
        %v991 = vmax.f32 %v861, 0.0
        %v992 = vmax.f32 %v866, 0.0
        %v993 = vmax.f32 %v869, 0.0
        %v994 = vmax.f32 %v874, 0.0
        %v995 = vmax.f32 %v877, 0.0
        %v996 = vmax.f32 %v882, 0.0
        %v997 = vmax.f32 %v885, 0.0
        %v998 = vmax.f32 %v890, 0.0
        %v999 = vmax.f32 %v893, 0.0
        %v1000 = vmax.f32 %v898, 0.0
        %v1001 = vmax.f32 %v901, 0.0
        %v1002 = vmax.f32 %v906, 0.0
        %v1003 = vmax.f32 %v909, 0.0
        %v1004 = vmax.f32 %v914, 0.0
        %v1005 = vmax.f32 %v917, 0.0
        %v1006 = vmax.f32 %v922, 0.0
        %v1007 = vmax.f32 %v925, 0.0
        %v1008 = vmax.f32 %v930, 0.0
        %v1009 = vmax.f32 %v933, 0.0
        %v1010 = vmax.f32 %v938, 0.0
        %v1011 = vmax.f32 %v941, 0.0
        %v1012 = vmax.f32 %v946, 0.0
        %v1013 = vmax.f32 %v949, 0.0
        %v1014 = vmax.f32 %v954, 0.0
        %v1015 = vmax.f32 %v957, 0.0
        %v1016 = vmax.f32 %v962, 0.0
        %v1017 = vmax.f32 %v965, 0.0
        %v1018 = vmax.f32 %v970, 0.0
        %v1019 = vmax.f32 %v973, 0.0
        %v1020 = vmax.f32 %v978, 0.0
        %v1021 = vmax.f32 %v981, 0.0
        %v1022 = vpack.c.bf16 %v985, %v984
        %v1023 = vpack.c.bf16 %v987, %v986
        %v1024 = vpack.c.bf16 %v989, %v988
        %v1025 = vpack.c.bf16 %v991, %v990
        %v1026 = vpack.c.bf16 %v993, %v992
        %v1027 = vpack.c.bf16 %v995, %v994
        %v1028 = vpack.c.bf16 %v997, %v996
        %v1029 = vpack.c.bf16 %v999, %v998
        %v1030 = vpack.c.bf16 %v1001, %v1000
        %v1031 = vpack.c.bf16 %v1003, %v1002
        %v1032 = vpack.c.bf16 %v1005, %v1004
        %v1033 = vpack.c.bf16 %v1007, %v1006
        %v1034 = vpack.c.bf16 %v1009, %v1008
        %v1035 = vpack.c.bf16 %v1011, %v1010
        %v1036 = vpack.c.bf16 %v1013, %v1012
        %v1037 = vpack.c.bf16 %v1015, %v1014
        %v1038 = vpack.c.bf16 %v1017, %v1016
        %v1039 = vpack.c.bf16 %v1019, %v1018
        %v1040 = vpack.c.bf16 %v1021, %v1020
        %v1041 = vld [vmem:[#allocation8] sm:$0xf]
        %v1042 = vld [vmem:[#allocation8 + $0x4] sm:$0xf]
        %v1043 = vld [vmem:[#allocation8 + $0x8] sm:$0xf]
        %v1044 = vld [vmem:[#allocation8 + $0xc] sm:$0xf]
        %v1045 = vld [vmem:[#allocation8 + $0x10] sm:$0xf]
        %v1046 = vld [vmem:[#allocation8 + $0x14] sm:$0xf]
        %v1047 = vld [vmem:[#allocation8 + $0x18] sm:$0xf]
        %v1048 = vld [vmem:[#allocation8 + $0x1c] sm:$0xf]
        %v1049 = vld [vmem:[#allocation8 + $0x20] sm:$0xf]
        %v1050 = vld [vmem:[#allocation8 + $0x24] sm:$0xf]
        %v1051 = vld [vmem:[#allocation8 + $0x28] sm:$0xf]
        %v1052 = vld [vmem:[#allocation8 + $0x2c] sm:$0xf]
        %v1053 = vld [vmem:[#allocation8 + $0x30] sm:$0xf]
        %v1054 = vld [vmem:[#allocation8 + $0x34] sm:$0xf]
        %v1055 = vld [vmem:[#allocation8 + $0x38] sm:$0xf]
        %v1056 = vld [vmem:[#allocation8 + $0x3c] sm:$0xf]
        %v1057 = vld [vmem:[%s6] sm:$0x1]
        %v1059 = vlaneseq
        %v1060 = vshrl.u32 %v1059, 7
        %v1061 = vsub.s32 0, %v1060
        %v1062 = vrot.slane %v1057, %v1061
        %v1080 = vunpack.c.l.b16 %v1041
        %v1081 = vunpack.c.l.b16 %v1042
        %v1082 = vunpack.c.l.b16 %v1043
        %v1083 = vunpack.c.l.b16 %v1044
        %v1084 = vunpack.c.l.b16 %v1045
        %v1085 = vunpack.c.l.b16 %v1046
        %v1086 = vunpack.c.l.b16 %v1047
        %v1087 = vunpack.c.l.b16 %v1048
        %v1088 = vunpack.c.l.b16 %v1049
        %v1089 = vunpack.c.l.b16 %v1050
        %v1090 = vunpack.c.l.b16 %v1051
        %v1091 = vunpack.c.l.b16 %v1052
        %v1092 = vunpack.c.l.b16 %v1053
        %v1093 = vunpack.c.l.b16 %v1054
        %v1094 = vunpack.c.l.b16 %v1055
        %v1095 = vunpack.c.l.b16 %v1056
        %v1096 = vpack.c.b16 %v1081, %v1080
        %v1097 = vpack.c.b16 %v1083, %v1082
        %v1098 = vpack.c.b16 %v1085, %v1084
        %v1099 = vpack.c.b16 %v1087, %v1086
        %v1100 = vpack.c.b16 %v1089, %v1088
        %v1101 = vpack.c.b16 %v1091, %v1090
        %v1102 = vpack.c.b16 %v1093, %v1092
        %v1103 = vpack.c.b16 %v1095, %v1094
        %1112 = vmatprep.subr.bf16.mxu0 0
        %1113 = vmatpush1.bf16.msra.mxu0 %v1103
        %1114 = vmatprep.subr.bf16.mxu0 0
        %1115 = vmatpush1.bf16.msra.mxu0 %v1102
        %1116 = vmatprep.subr.bf16.mxu0 0
        %1117 = vmatpush1.bf16.msra.mxu0 %v1101
        %1118 = vmatprep.subr.bf16.mxu0 0
        %1119 = vmatpush1.bf16.msra.mxu0 %v1100
        %1120 = vmatprep.subr.bf16.mxu0 0
        %1121 = vmatpush1.bf16.msra.mxu0 %v1099
        %1122 = vmatprep.subr.bf16.mxu0 0
        %1123 = vmatpush1.bf16.msra.mxu0 %v1098
        %1124 = vmatprep.subr.bf16.mxu0 0
        %1125 = vmatpush1.bf16.msra.mxu0 %v1097
        %1126 = vmatprep.subr.bf16.mxu0 0
        %1127 = vmatpush1.bf16.msra.mxu0 %v1096
        %1128 = vmatprep.subr.bf16.mxu0 0
        %1129 = vmatpush2.bf16.msra.mxu0 0
        %1130 = vmatprep.subr.bf16.mxu0 0
        %1131 = vmatpush2.bf16.msra.mxu0 0
        %1132 = vmatprep.subr.bf16.mxu0 0
        %1133 = vmatpush2.bf16.msra.mxu0 0
        %1134 = vmatprep.subr.bf16.mxu0 0
        %1135 = vmatpush2.bf16.msra.mxu0 0
        %1136 = vmatprep.subr.bf16.mxu0 0
        %1137 = vmatpush2.bf16.msra.mxu0 0
        %1138 = vmatprep.subr.bf16.mxu0 0
        %1139 = vmatpush2.bf16.msra.mxu0 0
        %1140 = vmatprep.subr.bf16.mxu0 0
        %1141 = vmatpush2.bf16.msra.mxu0 0
        %1142 = vmatprep.subr.bf16.mxu0 0
        %1143 = vmatpush2.bf16.msra.mxu0 0
        %1144 = vmatprep.mubr.bf16.mxu0 0
        %1145 = vmatmul.mubr.bf16.gmra.mxu0 %v1022
        %v1146 = vpop.f32.mrf.mxu0
        %v1147 = vadd.f32 %v1062, %v1146
        %v1148 = vpop.f32.mrf.mxu0
        %v1149 = vpop.f32.mrf.mxu0
        %v1150 = vadd.f32 %v1062, %v1149
        %v1151 = vpop.f32.mrf.mxu0
        %1152 = vmatprep.mubr.bf16.mxu0 0
        %1153 = vmatmul.mubr.bf16.gmra.mxu0 %v1023
        %v1154 = vpop.f32.mrf.mxu0
        %v1155 = vadd.f32 %v1062, %v1154
        %v1156 = vpop.f32.mrf.mxu0
        %v1157 = vpop.f32.mrf.mxu0
        %v1158 = vadd.f32 %v1062, %v1157
        %v1159 = vpop.f32.mrf.mxu0
        %1160 = vmatprep.mubr.bf16.mxu0 0
        %1161 = vmatmul.mubr.bf16.gmra.mxu0 %v1024
        %v1162 = vpop.f32.mrf.mxu0
        %v1163 = vadd.f32 %v1062, %v1162
        %v1164 = vpop.f32.mrf.mxu0
        %v1165 = vpop.f32.mrf.mxu0
        %v1166 = vadd.f32 %v1062, %v1165
        %v1167 = vpop.f32.mrf.mxu0
        %1168 = vmatprep.mubr.bf16.mxu0 0
        %1169 = vmatmul.mubr.bf16.gmra.mxu0 %v1025
        %v1170 = vpop.f32.mrf.mxu0
        %v1171 = vadd.f32 %v1062, %v1170
        %v1172 = vpop.f32.mrf.mxu0
        %v1173 = vpop.f32.mrf.mxu0
        %v1174 = vadd.f32 %v1062, %v1173
        %v1175 = vpop.f32.mrf.mxu0
        %1176 = vmatprep.mubr.bf16.mxu0 0
        %1177 = vmatmul.mubr.bf16.gmra.mxu0 %v1026
        %v1178 = vpop.f32.mrf.mxu0
        %v1179 = vadd.f32 %v1062, %v1178
        %v1180 = vpop.f32.mrf.mxu0
        %v1181 = vpop.f32.mrf.mxu0
        %v1182 = vadd.f32 %v1062, %v1181
        %v1183 = vpop.f32.mrf.mxu0
        %1184 = vmatprep.mubr.bf16.mxu0 0
        %1185 = vmatmul.mubr.bf16.gmra.mxu0 %v1027
        %v1186 = vpop.f32.mrf.mxu0
        %v1187 = vadd.f32 %v1062, %v1186
        %v1188 = vpop.f32.mrf.mxu0
        %v1189 = vpop.f32.mrf.mxu0
        %v1190 = vadd.f32 %v1062, %v1189
        %v1191 = vpop.f32.mrf.mxu0
        %1192 = vmatprep.mubr.bf16.mxu0 0
        %1193 = vmatmul.mubr.bf16.gmra.mxu0 %v1028
        %v1194 = vpop.f32.mrf.mxu0
        %v1195 = vadd.f32 %v1062, %v1194
        %v1196 = vpop.f32.mrf.mxu0
        %v1197 = vpop.f32.mrf.mxu0
        %v1198 = vadd.f32 %v1062, %v1197
        %v1199 = vpop.f32.mrf.mxu0
        %1200 = vmatprep.mubr.bf16.mxu0 0
        %1201 = vmatmul.mubr.bf16.gmra.mxu0 %v1029
        %v1202 = vpop.f32.mrf.mxu0
        %v1203 = vadd.f32 %v1062, %v1202
        %v1204 = vpop.f32.mrf.mxu0
        %v1205 = vpop.f32.mrf.mxu0
        %v1206 = vadd.f32 %v1062, %v1205
        %v1207 = vpop.f32.mrf.mxu0
        %1208 = vmatprep.mubr.bf16.mxu0 0
        %1209 = vmatmul.mubr.bf16.gmra.mxu0 %v1030
        %v1210 = vpop.f32.mrf.mxu0
        %v1211 = vadd.f32 %v1062, %v1210
        %v1212 = vpop.f32.mrf.mxu0
        %v1213 = vpop.f32.mrf.mxu0
        %v1214 = vadd.f32 %v1062, %v1213
        %v1215 = vpop.f32.mrf.mxu0
        %1216 = vmatprep.mubr.bf16.mxu0 0
        %1217 = vmatmul.mubr.bf16.gmra.mxu0 %v1031
        %v1218 = vpop.f32.mrf.mxu0
        %v1219 = vadd.f32 %v1062, %v1218
        %v1220 = vpop.f32.mrf.mxu0
        %v1221 = vpop.f32.mrf.mxu0
        %v1222 = vadd.f32 %v1062, %v1221
        %v1223 = vpop.f32.mrf.mxu0
        %1224 = vmatprep.mubr.bf16.mxu0 0
        %1225 = vmatmul.mubr.bf16.gmra.mxu0 %v1032
        %v1226 = vpop.f32.mrf.mxu0
        %v1227 = vadd.f32 %v1062, %v1226
        %v1228 = vpop.f32.mrf.mxu0
        %v1229 = vpop.f32.mrf.mxu0
        %v1230 = vadd.f32 %v1062, %v1229
        %v1231 = vpop.f32.mrf.mxu0
        %1232 = vmatprep.mubr.bf16.mxu0 0
        %1233 = vmatmul.mubr.bf16.gmra.mxu0 %v1033
        %v1234 = vpop.f32.mrf.mxu0
        %v1235 = vadd.f32 %v1062, %v1234
        %v1236 = vpop.f32.mrf.mxu0
        %v1237 = vpop.f32.mrf.mxu0
        %v1238 = vadd.f32 %v1062, %v1237
        %v1239 = vpop.f32.mrf.mxu0
        %1240 = vmatprep.mubr.bf16.mxu0 0
        %1241 = vmatmul.mubr.bf16.gmra.mxu0 %v1034
        %v1242 = vpop.f32.mrf.mxu0
        %v1243 = vadd.f32 %v1062, %v1242
        %v1244 = vpop.f32.mrf.mxu0
        %v1245 = vpop.f32.mrf.mxu0
        %v1246 = vadd.f32 %v1062, %v1245
        %v1247 = vpop.f32.mrf.mxu0
        %1248 = vmatprep.mubr.bf16.mxu0 0
        %1249 = vmatmul.mubr.bf16.gmra.mxu0 %v1035
        %v1250 = vpop.f32.mrf.mxu0
        %v1251 = vadd.f32 %v1062, %v1250
        %v1252 = vpop.f32.mrf.mxu0
        %v1253 = vpop.f32.mrf.mxu0
        %v1254 = vadd.f32 %v1062, %v1253
        %v1255 = vpop.f32.mrf.mxu0
        %1256 = vmatprep.mubr.bf16.mxu0 0
        %1257 = vmatmul.mubr.bf16.gmra.mxu0 %v1036
        %v1258 = vpop.f32.mrf.mxu0
        %v1259 = vadd.f32 %v1062, %v1258
        %v1260 = vpop.f32.mrf.mxu0
        %v1261 = vpop.f32.mrf.mxu0
        %v1262 = vadd.f32 %v1062, %v1261
        %v1263 = vpop.f32.mrf.mxu0
        %1264 = vmatprep.mubr.bf16.mxu0 0
        %1265 = vmatmul.mubr.bf16.gmra.mxu0 %v1037
        %v1266 = vpop.f32.mrf.mxu0
        %v1267 = vadd.f32 %v1062, %v1266
        %v1268 = vpop.f32.mrf.mxu0
        %v1269 = vpop.f32.mrf.mxu0
        %v1270 = vadd.f32 %v1062, %v1269
        %v1271 = vpop.f32.mrf.mxu0
        %1272 = vmatprep.mubr.bf16.mxu0 0
        %1273 = vmatmul.mubr.bf16.gmra.mxu0 %v1038
        %v1274 = vpop.f32.mrf.mxu0
        %v1275 = vadd.f32 %v1062, %v1274
        %v1276 = vpop.f32.mrf.mxu0
        %v1277 = vpop.f32.mrf.mxu0
        %v1278 = vadd.f32 %v1062, %v1277
        %v1279 = vpop.f32.mrf.mxu0
        %1280 = vmatprep.mubr.bf16.mxu0 0
        %1281 = vmatmul.mubr.bf16.gmra.mxu0 %v1039
        %v1282 = vpop.f32.mrf.mxu0
        %v1283 = vadd.f32 %v1062, %v1282
        %v1284 = vpop.f32.mrf.mxu0
        %v1285 = vpop.f32.mrf.mxu0
        %v1286 = vadd.f32 %v1062, %v1285
        %v1287 = vpop.f32.mrf.mxu0
        %1288 = vmatprep.mubr.bf16.mxu0 0
        %1289 = vmatmul.mubr.bf16.gmra.mxu0 %v1040
        %v1290 = vpop.f32.mrf.mxu0
        %v1291 = vadd.f32 %v1062, %v1290
        %v1292 = vpop.f32.mrf.mxu0
        %v1293 = vpop.f32.mrf.mxu0
        %v1294 = vadd.f32 %v1062, %v1293
        %v1295 = vpop.f32.mrf.mxu0
        %1296 = vdwg.mxu0
        %v1297 = vpack.c.bf16 %v1150, %v1147
        %v1298 = vpack.c.bf16 %v1158, %v1155
        %v1299 = vpack.c.bf16 %v1166, %v1163
        %v1300 = vpack.c.bf16 %v1174, %v1171
        %v1301 = vpack.c.bf16 %v1182, %v1179
        %v1302 = vpack.c.bf16 %v1190, %v1187
        %v1303 = vpack.c.bf16 %v1198, %v1195
        %v1304 = vpack.c.bf16 %v1206, %v1203
        %v1305 = vpack.c.bf16 %v1214, %v1211
        %v1306 = vpack.c.bf16 %v1222, %v1219
        %v1307 = vpack.c.bf16 %v1230, %v1227
        %v1308 = vpack.c.bf16 %v1238, %v1235
        %v1309 = vpack.c.bf16 %v1246, %v1243
        %v1310 = vpack.c.bf16 %v1254, %v1251
        %v1311 = vpack.c.bf16 %v1262, %v1259
        %v1312 = vpack.c.bf16 %v1270, %v1267
        %v1313 = vpack.c.bf16 %v1278, %v1275
        %v1314 = vpack.c.bf16 %v1286, %v1283
        %v1315 = vpack.c.bf16 %v1294, %v1291
        %v1335 = vunpack.c.l.b16 %v1297
        %v1336 = vunpack.c.h.b16 %v1297
        %v1337 = vunpack.c.l.b16 %v1298
        %v1338 = vunpack.c.h.b16 %v1298
        %v1339 = vunpack.c.l.b16 %v1299
        %v1340 = vunpack.c.h.b16 %v1299
        %v1341 = vunpack.c.l.b16 %v1300
        %v1342 = vunpack.c.h.b16 %v1300
        %v1343 = vunpack.c.l.b16 %v1301
        %v1344 = vunpack.c.h.b16 %v1301
        %v1345 = vunpack.c.l.b16 %v1302
        %v1346 = vunpack.c.h.b16 %v1302
        %v1347 = vunpack.c.l.b16 %v1303
        %v1348 = vunpack.c.h.b16 %v1303
        %v1349 = vunpack.c.l.b16 %v1304
        %v1350 = vunpack.c.h.b16 %v1304
        %v1351 = vunpack.c.l.b16 %v1305
        %v1352 = vunpack.c.h.b16 %v1305
        %v1353 = vunpack.c.l.b16 %v1306
        %v1354 = vunpack.c.h.b16 %v1306
        %v1355 = vunpack.c.l.b16 %v1307
        %v1356 = vunpack.c.h.b16 %v1307
        %v1357 = vunpack.c.l.b16 %v1308
        %v1358 = vunpack.c.h.b16 %v1308
        %v1359 = vunpack.c.l.b16 %v1309
        %v1360 = vunpack.c.h.b16 %v1309
        %v1361 = vunpack.c.l.b16 %v1310
        %v1362 = vunpack.c.h.b16 %v1310
        %v1363 = vunpack.c.l.b16 %v1311
        %v1364 = vunpack.c.h.b16 %v1311
        %v1365 = vunpack.c.l.b16 %v1312
        %v1366 = vunpack.c.h.b16 %v1312
        %v1367 = vunpack.c.l.b16 %v1313
        %v1368 = vunpack.c.h.b16 %v1313
        %v1369 = vunpack.c.l.b16 %v1314
        %v1370 = vunpack.c.h.b16 %v1314
        %v1371 = vunpack.c.l.b16 %v1315
        %v1372 = vunpack.c.h.b16 %v1315
        %v1373 = vpack.c.b16 %v1335, %v1335
        %v1374 = vpack.c.b16 %v1336, %v1336
        %v1375 = vpack.c.b16 %v1337, %v1337
        %v1376 = vpack.c.b16 %v1338, %v1338
        %v1377 = vpack.c.b16 %v1339, %v1339
        %v1378 = vpack.c.b16 %v1340, %v1340
        %v1379 = vpack.c.b16 %v1341, %v1341
        %v1380 = vpack.c.b16 %v1342, %v1342
        %v1381 = vpack.c.b16 %v1343, %v1343
        %v1382 = vpack.c.b16 %v1344, %v1344
        %v1383 = vpack.c.b16 %v1345, %v1345
        %v1384 = vpack.c.b16 %v1346, %v1346
        %v1385 = vpack.c.b16 %v1347, %v1347
        %v1386 = vpack.c.b16 %v1348, %v1348
        %v1387 = vpack.c.b16 %v1349, %v1349
        %v1388 = vpack.c.b16 %v1350, %v1350
        %v1389 = vpack.c.b16 %v1351, %v1351
        %v1390 = vpack.c.b16 %v1352, %v1352
        %v1391 = vpack.c.b16 %v1353, %v1353
        %v1392 = vpack.c.b16 %v1354, %v1354
        %v1393 = vpack.c.b16 %v1355, %v1355
        %v1394 = vpack.c.b16 %v1356, %v1356
        %v1395 = vpack.c.b16 %v1357, %v1357
        %v1396 = vpack.c.b16 %v1358, %v1358
        %v1397 = vpack.c.b16 %v1359, %v1359
        %v1398 = vpack.c.b16 %v1360, %v1360
        %v1399 = vpack.c.b16 %v1361, %v1361
        %v1400 = vpack.c.b16 %v1362, %v1362
        %v1401 = vpack.c.b16 %v1363, %v1363
        %v1402 = vpack.c.b16 %v1364, %v1364
        %v1403 = vpack.c.b16 %v1365, %v1365
        %v1404 = vpack.c.b16 %v1366, %v1366
        %v1405 = vpack.c.b16 %v1367, %v1367
        %v1406 = vpack.c.b16 %v1368, %v1368
        %v1407 = vpack.c.b16 %v1369, %v1369
        %v1408 = vpack.c.b16 %v1370, %v1370
        %v1409 = vpack.c.b16 %v1371, %v1371
        %v1410 = vpack.c.b16 %v1372, %v1372
        %1449 = vst [vmem:[%s346] sm:$0xf] %v1373
        %1450 = vst [vmem:[%s346 + $0x4] sm:$0xf] %v1374
        %1451 = vst [vmem:[%s346 + $0x8] sm:$0xf] %v1375
        %1452 = vst [vmem:[%s346 + $0xc] sm:$0xf] %v1376
        %1453 = vst [vmem:[%s346 + $0x10] sm:$0xf] %v1377
        %1454 = vst [vmem:[%s346 + $0x14] sm:$0xf] %v1378
        %1455 = vst [vmem:[%s346 + $0x18] sm:$0xf] %v1379
        %1456 = vst [vmem:[%s346 + $0x1c] sm:$0xf] %v1380
        %1457 = vst [vmem:[%s346 + $0x20] sm:$0xf] %v1381
        %1458 = vst [vmem:[%s346 + $0x24] sm:$0xf] %v1382
        %1459 = vst [vmem:[%s346 + $0x28] sm:$0xf] %v1383
        %1460 = vst [vmem:[%s346 + $0x2c] sm:$0xf] %v1384
        %1461 = vst [vmem:[%s346 + $0x30] sm:$0xf] %v1385
        %1462 = vst [vmem:[%s346 + $0x34] sm:$0xf] %v1386
        %1463 = vst [vmem:[%s346 + $0x38] sm:$0xf] %v1387
        %1464 = vst [vmem:[%s346 + $0x3c] sm:$0xf] %v1388
        %1465 = vst [vmem:[%s346 + $0x40] sm:$0xf] %v1389
        %1466 = vst [vmem:[%s346 + $0x44] sm:$0xf] %v1390
        %1467 = vst [vmem:[%s346 + $0x48] sm:$0xf] %v1391
        %1468 = vst [vmem:[%s346 + $0x4c] sm:$0xf] %v1392
        %1469 = vst [vmem:[%s346 + $0x50] sm:$0xf] %v1393
        %1470 = vst [vmem:[%s346 + $0x54] sm:$0xf] %v1394
        %1471 = vst [vmem:[%s346 + $0x58] sm:$0xf] %v1395
        %1472 = vst [vmem:[%s346 + $0x5c] sm:$0xf] %v1396
        %1473 = vst [vmem:[%s346 + $0x60] sm:$0xf] %v1397
        %1474 = vst [vmem:[%s346 + $0x64] sm:$0xf] %v1398
        %1475 = vst [vmem:[%s346 + $0x68] sm:$0xf] %v1399
        %1476 = vst [vmem:[%s346 + $0x6c] sm:$0xf] %v1400
        %1477 = vst [vmem:[%s346 + $0x70] sm:$0xf] %v1401
        %1478 = vst [vmem:[%s346 + $0x74] sm:$0xf] %v1402
        %1479 = vst [vmem:[%s346 + $0x78] sm:$0xf] %v1403
        %1480 = vst [vmem:[%s346 + $0x7c] sm:$0xf] %v1404
        %1481 = vst [vmem:[%s346 + $0x80] sm:$0xf] %v1405
        %1482 = vst [vmem:[%s346 + $0x84] sm:$0xf] %v1406
        %1483 = vst [vmem:[%s346 + $0x88] sm:$0xf] %v1407
        %1484 = vst [vmem:[%s346 + $0x8c] sm:$0xf] %v1408
        %1485 = vst [vmem:[%s346 + $0x90] sm:$0xf] %v1409
        %1486 = vst [vmem:[%s346 + $0x94] sm:$0xf] %v1410
        %s1487 = sand.u32 %s186, 1
        %s1488 = scalar_lea.sflag [#allocation4], %s1487
        %s1489 = sand.u32 %s186, 1
        %s1490 = smul.addr %s1489, 152
        %s1491 = scalar_lea.vmem [#allocation10], %s1490
        // Predicated region
        $region65: #{tpu_custom_call.1} parent=47 // pred_check
          %p1492 = pneg %p196
        $region66: #{tpu_custom_call.1} parent=47 // pred_check_branch
          %1494 = sbr.rel (%p1492) target = $region68
        $region67: #{tpu_custom_call.1} parent=47 // pred_region
          %s1495 = smul.u32 38, %s26
          %s1496 = ssub.s32 75, %s1495
          %p1497 = scmp.lt.s32.totalorder %s1496, 38
          %s1498 = scalar_select %p1497, %s1496, 38
          %s1499 = smul.u32 64, %s1498
          %s1501 = ssub.s32 2432, %s1499
          %1502 = vsyncadd %s1488, %s1501
          %p1503 = scmp.ne.s32.totalorder 0, %s1499
          %s1504 = smul.addr %s1495, 64
          %s1505 = scalar_lea.hbm %s7, %s1504
          %s1506 = smul.u32 4, %s1498
          %s1507 = sshll.u32 %s1491, 4
          %s1508 = int_to_ptr.vmem [resolvable:$true] %s1507
          %s1509 = sshll.u32 %s1506, 4
          %1513 = dma.vmem_to_hbm [thread:$0]  (%p1503), %s1508, %s1509, %s1505, %s1488, 64, 64, 4
        $region68: #{tpu_custom_call.1} parent=47 // pred_fallthru
          _
      $region48: #{tpu_custom_call.1} parent=5 // pred_fallthru
        _
      %p1514 = scmp.le.s32.totalorder 2, %s21
      // Predicated region
      $region69: #{tpu_custom_call.1} parent=5 // pred_check
        %p1515 = pneg %p1514
      $region70: #{tpu_custom_call.1} parent=5 // pred_check_branch
        %1517 = sbr.rel (%p1515) target = $region72
      $region71: #{tpu_custom_call.1} parent=5 // pred_region
        %s1518 = ssub.s32 %s21, 2
        // Predicated region
        $region73: #{tpu_custom_call.1} parent=71 // pred_check
          %p1519 = pneg %p202
        $region74: #{tpu_custom_call.1} parent=71 // pred_check_branch
          %1521 = sbr.rel (%p1519) target = $region76
        $region75: #{tpu_custom_call.1} parent=71 // pred_region
          %s1522 = sand.u32 %s187, 1
          %s1523 = scalar_lea.sflag [#allocation4], %s1522
          %s1524 = sand.u32 %s187, 1
          %s1525 = smul.addr %s1524, 152
          %s1526 = scalar_lea.vmem [#allocation10], %s1525
          %1527 = dma.done %s1523, 2432
        $region76: #{tpu_custom_call.1} parent=71 // pred_fallthru
          _
      $region72: #{tpu_custom_call.1} parent=5 // pred_fallthru
        _
    $region6: #{tpu_custom_call.1} parent=1 // loop_footer
      %s25 = sadd.s32 1, %s21
    $region7: #{tpu_custom_call.1} parent=1 // loop_footer_branch
      %20 = sbr.rel target = $region3
    $region8: #{tpu_custom_call.1} parent=1 // loop_exit
      _
    %1528 = vsyncpa [#allocation3], 1
    %s1529 = scalar_lea.sflag [#allocation3], 1
    %1530 = vsyncpa %s1529, 1
    %1531 = vsyncpa [#allocation6], 1
    %1532 = vsyncpa [#allocation9], 1
    %1533 = vsyncpa [#allocation4], 1
    %s1534 = scalar_lea.sflag [#allocation4], 1
    %1535 = vsyncpa %s1534, 1

</llo_original>
